<compile_context>
chip_gen: v5e
topology: v5e:2x2
jax: 0.10.0
libtpu: 0.0.40
codegen_flags: <defaults>
</compile_context>

<pallas_src>
import jax
import jax.numpy as jnp
from jax.experimental import pallas as pl
from jax.experimental.pallas import tpu as pltpu


# ----------------------------------------------------------------------------
# Fused Pallas kernel: [ConvBlock 3x3 + foldedBN + ReLU] x 2, taps folded into
# the reduction, bf16 MXU operands, f32 accumulation.
# ----------------------------------------------------------------------------
def _down_block_kernel(x_ref, w1_ref, b1_ref, w2_ref, b2_ref, o_ref, mid_ref):
    hp2, wp2, _ = x_ref.shape          # pooled input with +1 spatial halo
    hp, wp = hp2 - 2, wp2 - 2
    cmid = w1_ref.shape[2]
    cout = w2_ref.shape[2]

    # ---- ConvBlock 1: 3x3 conv (9 taps as the K reduction) + BN(folded) + ReLU
    acc = jnp.zeros((hp * wp, cmid), jnp.float32)
    for t in range(9):
        dy, dx = divmod(t, 3)
        win = x_ref[dy:dy + hp, dx:dx + wp, :].reshape(hp * wp, -1)   # bf16
        acc = acc + jnp.dot(win, w1_ref[t], preferred_element_type=jnp.float32)
    y1 = jnp.maximum(acc + b1_ref[...], 0.0)

    # conv1 activation never leaves VMEM: store (bf16) into the interior of a
    # zeroed halo scratch so ConvBlock 2 can read shifted windows directly.
    mid_ref[...] = jnp.zeros_like(mid_ref)
    mid_ref[1:hp + 1, 1:wp + 1, :] = (
        y1.reshape(hp, wp, cmid).astype(mid_ref.dtype))

    # ---- ConvBlock 2 ---------------------------------------------------------
    acc2 = jnp.zeros((hp * wp, cout), jnp.float32)
    for t in range(9):
        dy, dx = divmod(t, 3)
        win = mid_ref[dy:dy + hp, dx:dx + wp, :].reshape(hp * wp, cmid)
        acc2 = acc2 + jnp.dot(win, w2_ref[t], preferred_element_type=jnp.float32)
    y2 = jnp.maximum(acc2 + b2_ref[...], 0.0)
    o_ref[...] = y2.reshape(hp, wp, cout).astype(o_ref.dtype)


# ----------------------------------------------------------------------------
# Wrapper: NCHW in / NCHW out, matches _DownBlock.forward semantics.
# ----------------------------------------------------------------------------
def _fold_bn(p):
    """Fold eval-mode BN into the conv: (x*W + b)*s + t == x*(W*s) + (b*s + t)."""
    cin, cout = p["w"].shape[2], p["w"].shape[3]
    w_eff = (p["w"] * p["scale"][None, None, None, :]).astype(jnp.bfloat16)
    b_eff = (p["b"] * p["scale"] + p["shift"]).astype(jnp.float32)
    return w_eff.reshape(9, cin, cout), b_eff.reshape(1, cout)


def down_block_forward(x_nchw, params):
    x = jnp.transpose(x_nchw, (0, 2, 3, 1)).astype(jnp.float32)    # NCHW -> NHWC
    n, h, w, cin = x.shape
    hp, wp = h // 2, w // 2

    # MaxPool2d(kernel_size=2) + halo pad + bf16 cast: one cheap XLA pass.
    xp = x.reshape(n, hp, 2, wp, 2, cin).max(axis=(2, 4))
    xpad = jnp.pad(xp, ((0, 0), (1, 1), (1, 1), (0, 0))).astype(jnp.bfloat16)

    w1, b1 = _fold_bn(params["cb1"])
    w2, b2 = _fold_bn(params["cb2"])
    cmid, cout = w1.shape[2], w2.shape[2]

    flops = 2 * n * hp * wp * 9 * (cin * cmid + cmid * cout)
    bytes_accessed = (xpad.size * 2 + w1.size * 2 + w2.size * 2
                      + 4 * (b1.size + b2.size) + 4 * n * hp * wp * cout)

    out = pl.pallas_call(
        _down_block_kernel,
        out_shape=jax.ShapeDtypeStruct((n, hp, wp, cout), jnp.float32),
        grid=(n,),
        in_specs=[
            pl.BlockSpec((None, hp + 2, wp + 2, cin), lambda i: (i, 0, 0, 0)),
            pl.BlockSpec((9, cin, cmid), lambda i: (0, 0, 0)),
            pl.BlockSpec((1, cmid), lambda i: (0, 0)),
            pl.BlockSpec((9, cmid, cout), lambda i: (0, 0, 0)),
            pl.BlockSpec((1, cout), lambda i: (0, 0)),
        ],
        out_specs=pl.BlockSpec((None, hp, wp, cout), lambda i: (i, 0, 0, 0)),
        scratch_shapes=[pltpu.VMEM((hp + 2, wp + 2, cmid), jnp.bfloat16)],
        compiler_params=pltpu.CompilerParams(
            dimension_semantics=("parallel",),
            vmem_limit_bytes=32 * 1024 * 1024),
        cost_estimate=pl.CostEstimate(
            flops=flops, transcendentals=0, bytes_accessed=bytes_accessed),
    )(xpad, w1, b1, w2, b2)

    return jnp.transpose(out, (0, 3, 1, 2))                        # NHWC -> NCHW


# ----------------------------------------------------------------------------
# Deterministic synthetic parameters (no checkpoint).
# ----------------------------------------------------------------------------
def init_down_block_params(key, in_channels, out_channels, eps=1e-5):
    def conv_block_p(k, cin, cout):
        kw, kb, kgm, kbt, kmn, kvr = jax.random.split(k, 6)
        bound = float(9 * cin) ** -0.5
        w = jax.random.uniform(kw, (3, 3, cin, cout), jnp.float32, -bound, bound)
        b = jax.random.uniform(kb, (cout,), jnp.float32, -bound, bound)
        gamma = 1.0 + 0.1 * jax.random.normal(kgm, (cout,), jnp.float32)
        beta = 0.1 * jax.random.normal(kbt, (cout,), jnp.float32)
        mean = 0.1 * jax.random.normal(kmn, (cout,), jnp.float32)
        var = 1.0 + 0.1 * jax.random.uniform(kvr, (cout,), jnp.float32)
        scale = gamma / jnp.sqrt(var + eps)
        shift = beta - mean * scale
        return dict(w=w, b=b, scale=scale, shift=shift)

    k1, k2 = jax.random.split(key)
    return dict(cb1=conv_block_p(k1, in_channels, out_channels),
                cb2=conv_block_p(k2, out_channels, out_channels))


# ----------------------------------------------------------------------------
# Pure-JAX f32 reference (for correctness check).
# ----------------------------------------------------------------------------
def ref_forward(x_nchw, params):
    x = jnp.transpose(x_nchw, (0, 2, 3, 1)).astype(jnp.float32)
    n, h, w, c = x.shape
    x = x.reshape(n, h // 2, 2, w // 2, 2, c).max(axis=(2, 4))
    for name in ("cb1", "cb2"):
        p = params[name]
        y = jax.lax.conv_general_dilated(
            x, p["w"], window_strides=(1, 1), padding="SAME",
            dimension_numbers=("NHWC", "HWIO", "NHWC"))
        x = jnp.maximum((y + p["b"]) * p["scale"] + p["shift"], 0.0)
    return jnp.transpose(x, (0, 3, 1, 2))


if __name__ == "__main__":
    key = jax.random.PRNGKey(0)
    pkey, xkey = jax.random.split(key)

    in_channels, out_channels = 32, 64          # typical down-block channels
    params = init_down_block_params(pkey, in_channels, out_channels)
    x = jax.random.normal(xkey, (2, in_channels, 16, 16), jnp.float32)  # NCHW

    fwd = jax.jit(down_block_forward)
    out = jax.block_until_ready(fwd(x, params))

    assert out.shape == (2, out_channels, 8, 8), out.shape
    assert bool(jnp.all(jnp.isfinite(out)))

    ref = ref_forward(x, params)
    err = float(jnp.max(jnp.abs(out - ref)))
    assert err < 1e-1, f"max abs err vs f32 reference: {err}"

    print("KERNEL_OK")
</pallas_src>

<mosaic_0001>
module attributes {stable_mosaic.version = 11 : i64} {
  func.func @_down_block_kernel(%arg0: i32, %arg1: memref<1x10x10x32xbf16, #tpu.memory_space<vmem>>, %arg2: memref<9x32x64xbf16, #tpu.memory_space<vmem>>, %arg3: memref<1x64xf32, #tpu.memory_space<vmem>>, %arg4: memref<9x64x64xbf16, #tpu.memory_space<vmem>>, %arg5: memref<1x64xf32, #tpu.memory_space<vmem>>, %arg6: memref<1x8x8x64xf32, #tpu.memory_space<vmem>>, %arg7: memref<10x10x64xbf16, #tpu.memory_space<vmem>>) attributes {dimension_semantics = [#tpu.dimension_semantics<parallel>], iteration_bounds = array<i64: 2>, scalar_prefetch = 0 : i64, scratch_operands = 1 : i64, tpu.core_type = #tpu.core_type<tc>, window_params = [{transform_indices = @transform_0, window_bounds = array<i64: 1, 10, 10, 32>}, {pipeline_mode = #tpu.pipeline_mode<synchronous>, transform_indices = @transform_1, window_bounds = array<i64: 9, 32, 64>}, {pipeline_mode = #tpu.pipeline_mode<synchronous>, transform_indices = @transform_2, window_bounds = array<i64: 1, 64>}, {pipeline_mode = #tpu.pipeline_mode<synchronous>, transform_indices = @transform_3, window_bounds = array<i64: 9, 64, 64>}, {pipeline_mode = #tpu.pipeline_mode<synchronous>, transform_indices = @transform_4, window_bounds = array<i64: 1, 64>}, {transform_indices = @transform_5, window_bounds = array<i64: 1, 8, 8, 64>}]} {
    %cst = arith.constant 0.000000e+00 : f32
    %0 = vector.broadcast %cst : f32 to vector<64x64xf32>
    %c0 = arith.constant 0 : index
    %c0_0 = arith.constant 0 : index
    %c0_1 = arith.constant 0 : index
    %c0_2 = arith.constant 0 : index
    %1 = vector.load %arg1[%c0, %c0_0, %c0_1, %c0_2] : memref<1x10x10x32xbf16, #tpu.memory_space<vmem>>, vector<1x8x8x32xbf16>
    %2 = vector.shape_cast %1 : vector<1x8x8x32xbf16> to vector<8x8x32xbf16>
    %3 = vector.shape_cast %2 : vector<8x8x32xbf16> to vector<64x32xbf16>
    %c0_3 = arith.constant 0 : index
    %c0_4 = arith.constant 0 : index
    %c0_5 = arith.constant 0 : index
    %4 = vector.load %arg2[%c0_3, %c0_4, %c0_5] : memref<9x32x64xbf16, #tpu.memory_space<vmem>>, vector<1x32x64xbf16>
    %5 = vector.shape_cast %4 : vector<1x32x64xbf16> to vector<32x64xbf16>
    %cst_6 = arith.constant dense<0.000000e+00> : vector<64x64xf32>
    %6 = tpu.matmul %3, %5, %cst_6 {dimension_numbers = #tpu.dot_dimension_numbers<[1], [0], [0], [1], [0, 0, 1, 1], [], []>} : vector<64x32xbf16>, vector<32x64xbf16>, vector<64x64xf32> -> vector<64x64xf32>
    %7 = arith.addf %0, %6 : vector<64x64xf32>
    %c0_7 = arith.constant 0 : index
    %c0_8 = arith.constant 0 : index
    %c1 = arith.constant 1 : index
    %c0_9 = arith.constant 0 : index
    %8 = vector.load %arg1[%c0_7, %c0_8, %c1, %c0_9] : memref<1x10x10x32xbf16, #tpu.memory_space<vmem>>, vector<1x8x8x32xbf16>
    %9 = vector.shape_cast %8 : vector<1x8x8x32xbf16> to vector<8x8x32xbf16>
    %10 = vector.shape_cast %9 : vector<8x8x32xbf16> to vector<64x32xbf16>
    %c1_10 = arith.constant 1 : index
    %c0_11 = arith.constant 0 : index
    %c0_12 = arith.constant 0 : index
    %11 = vector.load %arg2[%c1_10, %c0_11, %c0_12] : memref<9x32x64xbf16, #tpu.memory_space<vmem>>, vector<1x32x64xbf16>
    %12 = vector.shape_cast %11 : vector<1x32x64xbf16> to vector<32x64xbf16>
    %cst_13 = arith.constant dense<0.000000e+00> : vector<64x64xf32>
    %13 = tpu.matmul %10, %12, %cst_13 {dimension_numbers = #tpu.dot_dimension_numbers<[1], [0], [0], [1], [0, 0, 1, 1], [], []>} : vector<64x32xbf16>, vector<32x64xbf16>, vector<64x64xf32> -> vector<64x64xf32>
    %14 = arith.addf %7, %13 : vector<64x64xf32>
    %c0_14 = arith.constant 0 : index
    %c0_15 = arith.constant 0 : index
    %c2 = arith.constant 2 : index
    %c0_16 = arith.constant 0 : index
    %15 = vector.load %arg1[%c0_14, %c0_15, %c2, %c0_16] : memref<1x10x10x32xbf16, #tpu.memory_space<vmem>>, vector<1x8x8x32xbf16>
    %16 = vector.shape_cast %15 : vector<1x8x8x32xbf16> to vector<8x8x32xbf16>
    %17 = vector.shape_cast %16 : vector<8x8x32xbf16> to vector<64x32xbf16>
    %c2_17 = arith.constant 2 : index
    %c0_18 = arith.constant 0 : index
    %c0_19 = arith.constant 0 : index
    %18 = vector.load %arg2[%c2_17, %c0_18, %c0_19] : memref<9x32x64xbf16, #tpu.memory_space<vmem>>, vector<1x32x64xbf16>
    %19 = vector.shape_cast %18 : vector<1x32x64xbf16> to vector<32x64xbf16>
    %cst_20 = arith.constant dense<0.000000e+00> : vector<64x64xf32>
    %20 = tpu.matmul %17, %19, %cst_20 {dimension_numbers = #tpu.dot_dimension_numbers<[1], [0], [0], [1], [0, 0, 1, 1], [], []>} : vector<64x32xbf16>, vector<32x64xbf16>, vector<64x64xf32> -> vector<64x64xf32>
    %21 = arith.addf %14, %20 : vector<64x64xf32>
    %c0_21 = arith.constant 0 : index
    %c1_22 = arith.constant 1 : index
    %c0_23 = arith.constant 0 : index
    %c0_24 = arith.constant 0 : index
    %22 = vector.load %arg1[%c0_21, %c1_22, %c0_23, %c0_24] : memref<1x10x10x32xbf16, #tpu.memory_space<vmem>>, vector<1x8x8x32xbf16>
    %23 = vector.shape_cast %22 : vector<1x8x8x32xbf16> to vector<8x8x32xbf16>
    %24 = vector.shape_cast %23 : vector<8x8x32xbf16> to vector<64x32xbf16>
    %c3 = arith.constant 3 : index
    %c0_25 = arith.constant 0 : index
    %c0_26 = arith.constant 0 : index
    %25 = vector.load %arg2[%c3, %c0_25, %c0_26] : memref<9x32x64xbf16, #tpu.memory_space<vmem>>, vector<1x32x64xbf16>
    %26 = vector.shape_cast %25 : vector<1x32x64xbf16> to vector<32x64xbf16>
    %cst_27 = arith.constant dense<0.000000e+00> : vector<64x64xf32>
    %27 = tpu.matmul %24, %26, %cst_27 {dimension_numbers = #tpu.dot_dimension_numbers<[1], [0], [0], [1], [0, 0, 1, 1], [], []>} : vector<64x32xbf16>, vector<32x64xbf16>, vector<64x64xf32> -> vector<64x64xf32>
    %28 = arith.addf %21, %27 : vector<64x64xf32>
    %c0_28 = arith.constant 0 : index
    %c1_29 = arith.constant 1 : index
    %c1_30 = arith.constant 1 : index
    %c0_31 = arith.constant 0 : index
    %29 = vector.load %arg1[%c0_28, %c1_29, %c1_30, %c0_31] : memref<1x10x10x32xbf16, #tpu.memory_space<vmem>>, vector<1x8x8x32xbf16>
    %30 = vector.shape_cast %29 : vector<1x8x8x32xbf16> to vector<8x8x32xbf16>
    %31 = vector.shape_cast %30 : vector<8x8x32xbf16> to vector<64x32xbf16>
    %c4 = arith.constant 4 : index
    %c0_32 = arith.constant 0 : index
    %c0_33 = arith.constant 0 : index
    %32 = vector.load %arg2[%c4, %c0_32, %c0_33] : memref<9x32x64xbf16, #tpu.memory_space<vmem>>, vector<1x32x64xbf16>
    %33 = vector.shape_cast %32 : vector<1x32x64xbf16> to vector<32x64xbf16>
    %cst_34 = arith.constant dense<0.000000e+00> : vector<64x64xf32>
    %34 = tpu.matmul %31, %33, %cst_34 {dimension_numbers = #tpu.dot_dimension_numbers<[1], [0], [0], [1], [0, 0, 1, 1], [], []>} : vector<64x32xbf16>, vector<32x64xbf16>, vector<64x64xf32> -> vector<64x64xf32>
    %35 = arith.addf %28, %34 : vector<64x64xf32>
    %c0_35 = arith.constant 0 : index
    %c1_36 = arith.constant 1 : index
    %c2_37 = arith.constant 2 : index
    %c0_38 = arith.constant 0 : index
    %36 = vector.load %arg1[%c0_35, %c1_36, %c2_37, %c0_38] : memref<1x10x10x32xbf16, #tpu.memory_space<vmem>>, vector<1x8x8x32xbf16>
    %37 = vector.shape_cast %36 : vector<1x8x8x32xbf16> to vector<8x8x32xbf16>
    %38 = vector.shape_cast %37 : vector<8x8x32xbf16> to vector<64x32xbf16>
    %c5 = arith.constant 5 : index
    %c0_39 = arith.constant 0 : index
    %c0_40 = arith.constant 0 : index
    %39 = vector.load %arg2[%c5, %c0_39, %c0_40] : memref<9x32x64xbf16, #tpu.memory_space<vmem>>, vector<1x32x64xbf16>
    %40 = vector.shape_cast %39 : vector<1x32x64xbf16> to vector<32x64xbf16>
    %cst_41 = arith.constant dense<0.000000e+00> : vector<64x64xf32>
    %41 = tpu.matmul %38, %40, %cst_41 {dimension_numbers = #tpu.dot_dimension_numbers<[1], [0], [0], [1], [0, 0, 1, 1], [], []>} : vector<64x32xbf16>, vector<32x64xbf16>, vector<64x64xf32> -> vector<64x64xf32>
    %42 = arith.addf %35, %41 : vector<64x64xf32>
    %c0_42 = arith.constant 0 : index
    %c2_43 = arith.constant 2 : index
    %c0_44 = arith.constant 0 : index
    %c0_45 = arith.constant 0 : index
    %43 = vector.load %arg1[%c0_42, %c2_43, %c0_44, %c0_45] : memref<1x10x10x32xbf16, #tpu.memory_space<vmem>>, vector<1x8x8x32xbf16>
    %44 = vector.shape_cast %43 : vector<1x8x8x32xbf16> to vector<8x8x32xbf16>
    %45 = vector.shape_cast %44 : vector<8x8x32xbf16> to vector<64x32xbf16>
    %c6 = arith.constant 6 : index
    %c0_46 = arith.constant 0 : index
    %c0_47 = arith.constant 0 : index
    %46 = vector.load %arg2[%c6, %c0_46, %c0_47] : memref<9x32x64xbf16, #tpu.memory_space<vmem>>, vector<1x32x64xbf16>
    %47 = vector.shape_cast %46 : vector<1x32x64xbf16> to vector<32x64xbf16>
    %cst_48 = arith.constant dense<0.000000e+00> : vector<64x64xf32>
    %48 = tpu.matmul %45, %47, %cst_48 {dimension_numbers = #tpu.dot_dimension_numbers<[1], [0], [0], [1], [0, 0, 1, 1], [], []>} : vector<64x32xbf16>, vector<32x64xbf16>, vector<64x64xf32> -> vector<64x64xf32>
    %49 = arith.addf %42, %48 : vector<64x64xf32>
    %c0_49 = arith.constant 0 : index
    %c2_50 = arith.constant 2 : index
    %c1_51 = arith.constant 1 : index
    %c0_52 = arith.constant 0 : index
    %50 = vector.load %arg1[%c0_49, %c2_50, %c1_51, %c0_52] : memref<1x10x10x32xbf16, #tpu.memory_space<vmem>>, vector<1x8x8x32xbf16>
    %51 = vector.shape_cast %50 : vector<1x8x8x32xbf16> to vector<8x8x32xbf16>
    %52 = vector.shape_cast %51 : vector<8x8x32xbf16> to vector<64x32xbf16>
    %c7 = arith.constant 7 : index
    %c0_53 = arith.constant 0 : index
    %c0_54 = arith.constant 0 : index
    %53 = vector.load %arg2[%c7, %c0_53, %c0_54] : memref<9x32x64xbf16, #tpu.memory_space<vmem>>, vector<1x32x64xbf16>
    %54 = vector.shape_cast %53 : vector<1x32x64xbf16> to vector<32x64xbf16>
    %cst_55 = arith.constant dense<0.000000e+00> : vector<64x64xf32>
    %55 = tpu.matmul %52, %54, %cst_55 {dimension_numbers = #tpu.dot_dimension_numbers<[1], [0], [0], [1], [0, 0, 1, 1], [], []>} : vector<64x32xbf16>, vector<32x64xbf16>, vector<64x64xf32> -> vector<64x64xf32>
    %56 = arith.addf %49, %55 : vector<64x64xf32>
    %c0_56 = arith.constant 0 : index
    %c2_57 = arith.constant 2 : index
    %c2_58 = arith.constant 2 : index
    %c0_59 = arith.constant 0 : index
    %57 = vector.load %arg1[%c0_56, %c2_57, %c2_58, %c0_59] : memref<1x10x10x32xbf16, #tpu.memory_space<vmem>>, vector<1x8x8x32xbf16>
    %58 = vector.shape_cast %57 : vector<1x8x8x32xbf16> to vector<8x8x32xbf16>
    %59 = vector.shape_cast %58 : vector<8x8x32xbf16> to vector<64x32xbf16>
    %c8 = arith.constant 8 : index
    %c0_60 = arith.constant 0 : index
    %c0_61 = arith.constant 0 : index
    %60 = vector.load %arg2[%c8, %c0_60, %c0_61] : memref<9x32x64xbf16, #tpu.memory_space<vmem>>, vector<1x32x64xbf16>
    %61 = vector.shape_cast %60 : vector<1x32x64xbf16> to vector<32x64xbf16>
    %cst_62 = arith.constant dense<0.000000e+00> : vector<64x64xf32>
    %62 = tpu.matmul %59, %61, %cst_62 {dimension_numbers = #tpu.dot_dimension_numbers<[1], [0], [0], [1], [0, 0, 1, 1], [], []>} : vector<64x32xbf16>, vector<32x64xbf16>, vector<64x64xf32> -> vector<64x64xf32>
    %63 = arith.addf %56, %62 : vector<64x64xf32>
    %c0_63 = arith.constant 0 : index
    %c0_64 = arith.constant 0 : index
    %64 = vector.load %arg3[%c0_63, %c0_64] : memref<1x64xf32, #tpu.memory_space<vmem>>, vector<1x64xf32>
    %65 = vector.broadcast %64 : vector<1x64xf32> to vector<64x64xf32>
    %66 = arith.addf %63, %65 : vector<64x64xf32>
    %cst_65 = arith.constant 0.000000e+00 : f32
    %67 = vector.broadcast %cst_65 : f32 to vector<64x64xf32>
    %68 = arith.maximumf %66, %67 : vector<64x64xf32>
    %cst_66 = arith.constant 0.000000e+00 : bf16
    %69 = vector.broadcast %cst_66 : bf16 to vector<10x10x64xbf16>
    %c0_67 = arith.constant 0 : index
    %c0_68 = arith.constant 0 : index
    %c0_69 = arith.constant 0 : index
    %70 = vector.load %arg7[%c0_67, %c0_68, %c0_69] : memref<10x10x64xbf16, #tpu.memory_space<vmem>>, vector<10x10x64xbf16>
    tpu.vector_store %arg7[%c0_67, %c0_68, %c0_69], %69 {strides = array<i32>} : memref<10x10x64xbf16, #tpu.memory_space<vmem>>, vector<10x10x64xbf16>,
    %71 = vector.shape_cast %68 : vector<64x64xf32> to vector<8x8x64xf32>
    %72 = arith.truncf %71 : vector<8x8x64xf32> to vector<8x8x64xbf16>
    %c1_70 = arith.constant 1 : index
    %c1_71 = arith.constant 1 : index
    %c0_72 = arith.constant 0 : index
    %73 = vector.load %arg7[%c1_70, %c1_71, %c0_72] : memref<10x10x64xbf16, #tpu.memory_space<vmem>>, vector<8x8x64xbf16>
    tpu.vector_store %arg7[%c1_70, %c1_71, %c0_72], %72 {strides = array<i32>} : memref<10x10x64xbf16, #tpu.memory_space<vmem>>, vector<8x8x64xbf16>,
    %cst_73 = arith.constant 0.000000e+00 : f32
    %74 = vector.broadcast %cst_73 : f32 to vector<64x64xf32>
    %c0_74 = arith.constant 0 : index
    %c0_75 = arith.constant 0 : index
    %c0_76 = arith.constant 0 : index
    %75 = vector.load %arg7[%c0_74, %c0_75, %c0_76] : memref<10x10x64xbf16, #tpu.memory_space<vmem>>, vector<8x8x64xbf16>
    %76 = vector.shape_cast %75 : vector<8x8x64xbf16> to vector<64x64xbf16>
    %c0_77 = arith.constant 0 : index
    %c0_78 = arith.constant 0 : index
    %c0_79 = arith.constant 0 : index
    %77 = vector.load %arg4[%c0_77, %c0_78, %c0_79] : memref<9x64x64xbf16, #tpu.memory_space<vmem>>, vector<1x64x64xbf16>
    %78 = vector.shape_cast %77 : vector<1x64x64xbf16> to vector<64x64xbf16>
    %cst_80 = arith.constant dense<0.000000e+00> : vector<64x64xf32>
    %79 = tpu.matmul %76, %78, %cst_80 {dimension_numbers = #tpu.dot_dimension_numbers<[1], [0], [0], [1], [0, 0, 1, 1], [], []>} : vector<64x64xbf16>, vector<64x64xbf16>, vector<64x64xf32> -> vector<64x64xf32>
    %80 = arith.addf %74, %79 : vector<64x64xf32>
    %c0_81 = arith.constant 0 : index
    %c1_82 = arith.constant 1 : index
    %c0_83 = arith.constant 0 : index
    %81 = vector.load %arg7[%c0_81, %c1_82, %c0_83] : memref<10x10x64xbf16, #tpu.memory_space<vmem>>, vector<8x8x64xbf16>
    %82 = vector.shape_cast %81 : vector<8x8x64xbf16> to vector<64x64xbf16>
    %c1_84 = arith.constant 1 : index
    %c0_85 = arith.constant 0 : index
    %c0_86 = arith.constant 0 : index
    %83 = vector.load %arg4[%c1_84, %c0_85, %c0_86] : memref<9x64x64xbf16, #tpu.memory_space<vmem>>, vector<1x64x64xbf16>
    %84 = vector.shape_cast %83 : vector<1x64x64xbf16> to vector<64x64xbf16>
    %cst_87 = arith.constant dense<0.000000e+00> : vector<64x64xf32>
    %85 = tpu.matmul %82, %84, %cst_87 {dimension_numbers = #tpu.dot_dimension_numbers<[1], [0], [0], [1], [0, 0, 1, 1], [], []>} : vector<64x64xbf16>, vector<64x64xbf16>, vector<64x64xf32> -> vector<64x64xf32>
    %86 = arith.addf %80, %85 : vector<64x64xf32>
    %c0_88 = arith.constant 0 : index
    %c2_89 = arith.constant 2 : index
    %c0_90 = arith.constant 0 : index
    %87 = vector.load %arg7[%c0_88, %c2_89, %c0_90] : memref<10x10x64xbf16, #tpu.memory_space<vmem>>, vector<8x8x64xbf16>
    %88 = vector.shape_cast %87 : vector<8x8x64xbf16> to vector<64x64xbf16>
    %c2_91 = arith.constant 2 : index
    %c0_92 = arith.constant 0 : index
    %c0_93 = arith.constant 0 : index
    %89 = vector.load %arg4[%c2_91, %c0_92, %c0_93] : memref<9x64x64xbf16, #tpu.memory_space<vmem>>, vector<1x64x64xbf16>
    %90 = vector.shape_cast %89 : vector<1x64x64xbf16> to vector<64x64xbf16>
    %cst_94 = arith.constant dense<0.000000e+00> : vector<64x64xf32>
    %91 = tpu.matmul %88, %90, %cst_94 {dimension_numbers = #tpu.dot_dimension_numbers<[1], [0], [0], [1], [0, 0, 1, 1], [], []>} : vector<64x64xbf16>, vector<64x64xbf16>, vector<64x64xf32> -> vector<64x64xf32>
    %92 = arith.addf %86, %91 : vector<64x64xf32>
    %c1_95 = arith.constant 1 : index
    %c0_96 = arith.constant 0 : index
    %c0_97 = arith.constant 0 : index
    %93 = vector.load %arg7[%c1_95, %c0_96, %c0_97] : memref<10x10x64xbf16, #tpu.memory_space<vmem>>, vector<8x8x64xbf16>
    %94 = vector.shape_cast %93 : vector<8x8x64xbf16> to vector<64x64xbf16>
    %c3_98 = arith.constant 3 : index
    %c0_99 = arith.constant 0 : index
    %c0_100 = arith.constant 0 : index
    %95 = vector.load %arg4[%c3_98, %c0_99, %c0_100] : memref<9x64x64xbf16, #tpu.memory_space<vmem>>, vector<1x64x64xbf16>
    %96 = vector.shape_cast %95 : vector<1x64x64xbf16> to vector<64x64xbf16>
    %cst_101 = arith.constant dense<0.000000e+00> : vector<64x64xf32>
    %97 = tpu.matmul %94, %96, %cst_101 {dimension_numbers = #tpu.dot_dimension_numbers<[1], [0], [0], [1], [0, 0, 1, 1], [], []>} : vector<64x64xbf16>, vector<64x64xbf16>, vector<64x64xf32> -> vector<64x64xf32>
    %98 = arith.addf %92, %97 : vector<64x64xf32>
    %c1_102 = arith.constant 1 : index
    %c1_103 = arith.constant 1 : index
    %c0_104 = arith.constant 0 : index
    %99 = vector.load %arg7[%c1_102, %c1_103, %c0_104] : memref<10x10x64xbf16, #tpu.memory_space<vmem>>, vector<8x8x64xbf16>
    %100 = vector.shape_cast %99 : vector<8x8x64xbf16> to vector<64x64xbf16>
    %c4_105 = arith.constant 4 : index
    %c0_106 = arith.constant 0 : index
    %c0_107 = arith.constant 0 : index
    %101 = vector.load %arg4[%c4_105, %c0_106, %c0_107] : memref<9x64x64xbf16, #tpu.memory_space<vmem>>, vector<1x64x64xbf16>
    %102 = vector.shape_cast %101 : vector<1x64x64xbf16> to vector<64x64xbf16>
    %cst_108 = arith.constant dense<0.000000e+00> : vector<64x64xf32>
    %103 = tpu.matmul %100, %102, %cst_108 {dimension_numbers = #tpu.dot_dimension_numbers<[1], [0], [0], [1], [0, 0, 1, 1], [], []>} : vector<64x64xbf16>, vector<64x64xbf16>, vector<64x64xf32> -> vector<64x64xf32>
    %104 = arith.addf %98, %103 : vector<64x64xf32>
    %c1_109 = arith.constant 1 : index
    %c2_110 = arith.constant 2 : index
    %c0_111 = arith.constant 0 : index
    %105 = vector.load %arg7[%c1_109, %c2_110, %c0_111] : memref<10x10x64xbf16, #tpu.memory_space<vmem>>, vector<8x8x64xbf16>
    %106 = vector.shape_cast %105 : vector<8x8x64xbf16> to vector<64x64xbf16>
    %c5_112 = arith.constant 5 : index
    %c0_113 = arith.constant 0 : index
    %c0_114 = arith.constant 0 : index
    %107 = vector.load %arg4[%c5_112, %c0_113, %c0_114] : memref<9x64x64xbf16, #tpu.memory_space<vmem>>, vector<1x64x64xbf16>
    %108 = vector.shape_cast %107 : vector<1x64x64xbf16> to vector<64x64xbf16>
    %cst_115 = arith.constant dense<0.000000e+00> : vector<64x64xf32>
    %109 = tpu.matmul %106, %108, %cst_115 {dimension_numbers = #tpu.dot_dimension_numbers<[1], [0], [0], [1], [0, 0, 1, 1], [], []>} : vector<64x64xbf16>, vector<64x64xbf16>, vector<64x64xf32> -> vector<64x64xf32>
    %110 = arith.addf %104, %109 : vector<64x64xf32>
    %c2_116 = arith.constant 2 : index
    %c0_117 = arith.constant 0 : index
    %c0_118 = arith.constant 0 : index
    %111 = vector.load %arg7[%c2_116, %c0_117, %c0_118] : memref<10x10x64xbf16, #tpu.memory_space<vmem>>, vector<8x8x64xbf16>
    %112 = vector.shape_cast %111 : vector<8x8x64xbf16> to vector<64x64xbf16>
    %c6_119 = arith.constant 6 : index
    %c0_120 = arith.constant 0 : index
    %c0_121 = arith.constant 0 : index
    %113 = vector.load %arg4[%c6_119, %c0_120, %c0_121] : memref<9x64x64xbf16, #tpu.memory_space<vmem>>, vector<1x64x64xbf16>
    %114 = vector.shape_cast %113 : vector<1x64x64xbf16> to vector<64x64xbf16>
    %cst_122 = arith.constant dense<0.000000e+00> : vector<64x64xf32>
    %115 = tpu.matmul %112, %114, %cst_122 {dimension_numbers = #tpu.dot_dimension_numbers<[1], [0], [0], [1], [0, 0, 1, 1], [], []>} : vector<64x64xbf16>, vector<64x64xbf16>, vector<64x64xf32> -> vector<64x64xf32>
    %116 = arith.addf %110, %115 : vector<64x64xf32>
    %c2_123 = arith.constant 2 : index
    %c1_124 = arith.constant 1 : index
    %c0_125 = arith.constant 0 : index
    %117 = vector.load %arg7[%c2_123, %c1_124, %c0_125] : memref<10x10x64xbf16, #tpu.memory_space<vmem>>, vector<8x8x64xbf16>
    %118 = vector.shape_cast %117 : vector<8x8x64xbf16> to vector<64x64xbf16>
    %c7_126 = arith.constant 7 : index
    %c0_127 = arith.constant 0 : index
    %c0_128 = arith.constant 0 : index
    %119 = vector.load %arg4[%c7_126, %c0_127, %c0_128] : memref<9x64x64xbf16, #tpu.memory_space<vmem>>, vector<1x64x64xbf16>
    %120 = vector.shape_cast %119 : vector<1x64x64xbf16> to vector<64x64xbf16>
    %cst_129 = arith.constant dense<0.000000e+00> : vector<64x64xf32>
    %121 = tpu.matmul %118, %120, %cst_129 {dimension_numbers = #tpu.dot_dimension_numbers<[1], [0], [0], [1], [0, 0, 1, 1], [], []>} : vector<64x64xbf16>, vector<64x64xbf16>, vector<64x64xf32> -> vector<64x64xf32>
    %122 = arith.addf %116, %121 : vector<64x64xf32>
    %c2_130 = arith.constant 2 : index
    %c2_131 = arith.constant 2 : index
    %c0_132 = arith.constant 0 : index
    %123 = vector.load %arg7[%c2_130, %c2_131, %c0_132] : memref<10x10x64xbf16, #tpu.memory_space<vmem>>, vector<8x8x64xbf16>
    %124 = vector.shape_cast %123 : vector<8x8x64xbf16> to vector<64x64xbf16>
    %c8_133 = arith.constant 8 : index
    %c0_134 = arith.constant 0 : index
    %c0_135 = arith.constant 0 : index
    %125 = vector.load %arg4[%c8_133, %c0_134, %c0_135] : memref<9x64x64xbf16, #tpu.memory_space<vmem>>, vector<1x64x64xbf16>
    %126 = vector.shape_cast %125 : vector<1x64x64xbf16> to vector<64x64xbf16>
    %cst_136 = arith.constant dense<0.000000e+00> : vector<64x64xf32>
    %127 = tpu.matmul %124, %126, %cst_136 {dimension_numbers = #tpu.dot_dimension_numbers<[1], [0], [0], [1], [0, 0, 1, 1], [], []>} : vector<64x64xbf16>, vector<64x64xbf16>, vector<64x64xf32> -> vector<64x64xf32>
    %128 = arith.addf %122, %127 : vector<64x64xf32>
    %c0_137 = arith.constant 0 : index
    %c0_138 = arith.constant 0 : index
    %129 = vector.load %arg5[%c0_137, %c0_138] : memref<1x64xf32, #tpu.memory_space<vmem>>, vector<1x64xf32>
    %130 = vector.broadcast %129 : vector<1x64xf32> to vector<64x64xf32>
    %131 = arith.addf %128, %130 : vector<64x64xf32>
    %cst_139 = arith.constant 0.000000e+00 : f32
    %132 = vector.broadcast %cst_139 : f32 to vector<64x64xf32>
    %133 = arith.maximumf %131, %132 : vector<64x64xf32>
    %134 = vector.shape_cast %133 : vector<64x64xf32> to vector<8x8x64xf32>
    %c0_140 = arith.constant 0 : index
    %c0_141 = arith.constant 0 : index
    %c0_142 = arith.constant 0 : index
    %c0_143 = arith.constant 0 : index
    %135 = vector.load %arg6[%c0_140, %c0_141, %c0_142, %c0_143] : memref<1x8x8x64xf32, #tpu.memory_space<vmem>>, vector<1x8x8x64xf32>
    %136 = vector.shape_cast %135 : vector<1x8x8x64xf32> to vector<8x8x64xf32>
    %137 = vector.shape_cast %134 : vector<8x8x64xf32> to vector<1x8x8x64xf32>
    tpu.vector_store %arg6[%c0_140, %c0_141, %c0_142, %c0_143], %137 {strides = array<i32>} : memref<1x8x8x64xf32, #tpu.memory_space<vmem>>, vector<1x8x8x64xf32>,
    return
  }
  func.func @transform_0(%arg0: i32) -> (i32, i32, i32, i32) {
    %c0_i32 = arith.constant 0 : i32
    %c0_i32_0 = arith.constant 0 : i32
    %c0_i32_1 = arith.constant 0 : i32
    %c0_i32_2 = arith.constant 0 : i32
    return %arg0, %c0_i32, %c0_i32_0, %c0_i32_1 : i32, i32, i32, i32
  }
  func.func @transform_1(%arg0: i32) -> (i32, i32, i32) {
    %c0_i32 = arith.constant 0 : i32
    %c0_i32_0 = arith.constant 0 : i32
    %c0_i32_1 = arith.constant 0 : i32
    %c0_i32_2 = arith.constant 0 : i32
    return %c0_i32, %c0_i32_0, %c0_i32_1 : i32, i32, i32
  }
  func.func @transform_2(%arg0: i32) -> (i32, i32) {
    %c0_i32 = arith.constant 0 : i32
    %c0_i32_0 = arith.constant 0 : i32
    %c0_i32_1 = arith.constant 0 : i32
    return %c0_i32, %c0_i32_0 : i32, i32
  }
  func.func @transform_3(%arg0: i32) -> (i32, i32, i32) {
    %c0_i32 = arith.constant 0 : i32
    %c0_i32_0 = arith.constant 0 : i32
    %c0_i32_1 = arith.constant 0 : i32
    %c0_i32_2 = arith.constant 0 : i32
    return %c0_i32, %c0_i32_0, %c0_i32_1 : i32, i32, i32
  }
  func.func @transform_4(%arg0: i32) -> (i32, i32) {
    %c0_i32 = arith.constant 0 : i32
    %c0_i32_0 = arith.constant 0 : i32
    %c0_i32_1 = arith.constant 0 : i32
    return %c0_i32, %c0_i32_0 : i32, i32
  }
  func.func @transform_5(%arg0: i32) -> (i32, i32, i32, i32) {
    %c0_i32 = arith.constant 0 : i32
    %c0_i32_0 = arith.constant 0 : i32
    %c0_i32_1 = arith.constant 0 : i32
    %c0_i32_2 = arith.constant 0 : i32
    return %arg0, %c0_i32, %c0_i32_0, %c0_i32_1 : i32, i32, i32, i32
  }
}

</mosaic_0001>

<llo_original>
// kernel: down_block_forward.1
$region0: #{down_block_forward.1}
  #allocation0 [shape = 'u32[]', space=smem, size = 0x4, offset = 0x4, fixed_abs, tag = 'smem constant byte address 0x4 - core index']
  #allocation1 [shape = 'u32[72,128]{1,0:T(1,128)}', space=vmem, size = 0x9000, scoped, tag = 'internal scratch']
  #allocation2 [shape = 'bf16[10,10,64]{2,1,0:T(8,128)(2,1)}', space=vmem, size = 0xa000, scoped, tag = 'scratch operand']
  %s0 = inlined_call_operand.vmem [shape: bf16[2,10,10,32], index: 0, kind: input, shape index: {}]
  %s1 = inlined_call_operand.vmem [shape: bf16[9,32,64], index: 1, kind: input, shape index: {}]
  %s2 = inlined_call_operand.vmem [shape: f32[1,64], index: 2, kind: input, shape index: {}]
  %s3 = inlined_call_operand.vmem [shape: bf16[9,64,64], index: 3, kind: input, shape index: {}]
  %s4 = inlined_call_operand.vmem [shape: f32[1,64], index: 4, kind: input, shape index: {}]
  %s5 = inlined_call_operand.hbm [shape: f32[2,8,8,64], index: 5, kind: output, shape index: {}]
  %s6 = sld [smem:[#allocation0]]
  $region53: #{down_block_forward.1} parent=0
    _
  %s8 = ssub.s32 1, %s6
  %s9 = scalar_select 0, %s8, %s6
  $region1: #{down_block_forward.1} parent=0
    #allocation3 [shape = 'u8[65536]{0}', space=vmem, size = 0x10000, scoped, tag = 'output window, operand 0']
    #allocation4 [shape = 's32[2]{0}', space=sflag, size = 0x8, scoped, tag = 'scoped memory for down_block_forward.1']
    %10 = vsyncpa [#allocation4], 0
    %s11 = scalar_lea.sflag [#allocation4], 1
    %12 = vsyncpa %s11, 0
    loop: start=0, step=1, limit=4
    $region2: #{down_block_forward.1} parent=1 // loop_pre_header
      _
    $region3: #{down_block_forward.1} parent=1 // loop_header
      %s14 = sphi 0, %s18
      %p15 = scmp.ge.s32.totalorder %s14, 4
      %s24 = sphi 0, %s26
      %s27 = sphi 0, %s24
      %s28 = sphi 0, %s27
      %s44 = sphi 0, %s28
      %s48 = sphi 0, %s48
      %s50 = sphi 0, %s48
      %s51 = sphi 0, %s50
      %s65 = sphi 0, %s51
      %s69 = sphi 0, %s69
      %s71 = sphi 0, %s69
      %s72 = sphi 0, %s71
      %s86 = sphi 0, %s72
      %s90 = sphi 0, %s90
      %s92 = sphi 0, %s90
      %s93 = sphi 0, %s92
      %s107 = sphi 0, %s93
      %s111 = sphi 0, %s111
      %s113 = sphi 0, %s111
      %s114 = sphi 0, %s113
      %s128 = sphi 0, %s114
      %s134 = sphi 0, %s136
      %s137 = sphi 0, %s134
      %s138 = sphi 0, %s137
      %s154 = sphi 0, %s138
    $region4: #{down_block_forward.1} parent=1 // loop_header_branch
      %17 = sbr.rel (%p15) target = $region8
    $region5: #{down_block_forward.1} parent=1 // loop_body
      %s19 = ssub.s32 %s14, 1
      %s20 = ssub.s32 %s14, 2
      %s21 = sadd.s32 %s14, 1
      %s22 = ssub.s32 %s14, %s21
      %p23 = scmp.eq.s32.totalorder %s22, 0
      %s25 = sadd.s32 %s24, 1
      %s26 = scalar_select %p23, %s24, %s25
      %p29 = pneg %p23
      %p30 = scmp.eq.s32.totalorder %s14, 1
      %p31 = por %p29, %p30
      %p32 = scmp.ne.s32.totalorder %s24, %s27
      %p33 = scmp.eq.s32.totalorder %s14, 0
      %p34 = por %p32, %p33
      %p35 = scmp.ne.s32.totalorder %s24, %s27
      %p36 = scmp.eq.s32.totalorder %s19, 1
      %p37 = por %p35, %p36
      %p38 = scmp.ne.s32.totalorder %s27, %s28
      %p39 = scmp.eq.s32.totalorder %s19, 0
      %p40 = por %p38, %p39
      %p41 = scmp.ne.s32.totalorder %s27, %s28
      %p42 = scmp.eq.s32.totalorder %s20, 1
      %p43 = por %p41, %p42
      %p45 = scmp.ne.s32.totalorder %s28, %s44
      %p46 = scmp.eq.s32.totalorder %s20, 0
      %p47 = por %p45, %p46
      %s49 = sadd.s32 %s48, 1
      %p52 = scmp.eq.s32.totalorder %s14, 1
      %p53 = scmp.ne.s32.totalorder %s48, %s50
      %p54 = scmp.eq.s32.totalorder %s14, 0
      %p55 = por %p53, %p54
      %p56 = scmp.ne.s32.totalorder %s48, %s50
      %p57 = scmp.eq.s32.totalorder %s19, 1
      %p58 = por %p56, %p57
      %p59 = scmp.ne.s32.totalorder %s50, %s51
      %p60 = scmp.eq.s32.totalorder %s19, 0
      %p61 = por %p59, %p60
      %p62 = scmp.ne.s32.totalorder %s50, %s51
      %p63 = scmp.eq.s32.totalorder %s20, 1
      %p64 = por %p62, %p63
      %p66 = scmp.ne.s32.totalorder %s51, %s65
      %p67 = scmp.eq.s32.totalorder %s20, 0
      %p68 = por %p66, %p67
      %s70 = sadd.s32 %s69, 1
      %p73 = scmp.eq.s32.totalorder %s14, 1
      %p74 = scmp.ne.s32.totalorder %s69, %s71
      %p75 = scmp.eq.s32.totalorder %s14, 0
      %p76 = por %p74, %p75
      %p77 = scmp.ne.s32.totalorder %s69, %s71
      %p78 = scmp.eq.s32.totalorder %s19, 1
      %p79 = por %p77, %p78
      %p80 = scmp.ne.s32.totalorder %s71, %s72
      %p81 = scmp.eq.s32.totalorder %s19, 0
      %p82 = por %p80, %p81
      %p83 = scmp.ne.s32.totalorder %s71, %s72
      %p84 = scmp.eq.s32.totalorder %s20, 1
      %p85 = por %p83, %p84
      %p87 = scmp.ne.s32.totalorder %s72, %s86
      %p88 = scmp.eq.s32.totalorder %s20, 0
      %p89 = por %p87, %p88
      %s91 = sadd.s32 %s90, 1
      %p94 = scmp.eq.s32.totalorder %s14, 1
      %p95 = scmp.ne.s32.totalorder %s90, %s92
      %p96 = scmp.eq.s32.totalorder %s14, 0
      %p97 = por %p95, %p96
      %p98 = scmp.ne.s32.totalorder %s90, %s92
      %p99 = scmp.eq.s32.totalorder %s19, 1
      %p100 = por %p98, %p99
      %p101 = scmp.ne.s32.totalorder %s92, %s93
      %p102 = scmp.eq.s32.totalorder %s19, 0
      %p103 = por %p101, %p102
      %p104 = scmp.ne.s32.totalorder %s92, %s93
      %p105 = scmp.eq.s32.totalorder %s20, 1
      %p106 = por %p104, %p105
      %p108 = scmp.ne.s32.totalorder %s93, %s107
      %p109 = scmp.eq.s32.totalorder %s20, 0
      %p110 = por %p108, %p109
      %s112 = sadd.s32 %s111, 1
      %p115 = scmp.eq.s32.totalorder %s14, 1
      %p116 = scmp.ne.s32.totalorder %s111, %s113
      %p117 = scmp.eq.s32.totalorder %s14, 0
      %p118 = por %p116, %p117
      %p119 = scmp.ne.s32.totalorder %s111, %s113
      %p120 = scmp.eq.s32.totalorder %s19, 1
      %p121 = por %p119, %p120
      %p122 = scmp.ne.s32.totalorder %s113, %s114
      %p123 = scmp.eq.s32.totalorder %s19, 0
      %p124 = por %p122, %p123
      %p125 = scmp.ne.s32.totalorder %s113, %s114
      %p126 = scmp.eq.s32.totalorder %s20, 1
      %p127 = por %p125, %p126
      %p129 = scmp.ne.s32.totalorder %s114, %s128
      %p130 = scmp.eq.s32.totalorder %s20, 0
      %p131 = por %p129, %p130
      %s132 = ssub.s32 %s14, %s21
      %p133 = scmp.eq.s32.totalorder %s132, 0
      %s135 = sadd.s32 %s134, 1
      %s136 = scalar_select %p133, %s134, %s135
      %p139 = pneg %p133
      %p140 = scmp.eq.s32.totalorder %s14, 1
      %p141 = por %p139, %p140
      %p142 = scmp.ne.s32.totalorder %s134, %s137
      %p143 = scmp.eq.s32.totalorder %s14, 0
      %p144 = por %p142, %p143
      %p145 = scmp.ne.s32.totalorder %s134, %s137
      %p146 = scmp.eq.s32.totalorder %s19, 1
      %p147 = por %p145, %p146
      %p148 = scmp.ne.s32.totalorder %s137, %s138
      %p149 = scmp.eq.s32.totalorder %s19, 0
      %p150 = por %p148, %p149
      %p151 = scmp.ne.s32.totalorder %s137, %s138
      %p152 = scmp.eq.s32.totalorder %s20, 1
      %p153 = por %p151, %p152
      %p155 = scmp.ne.s32.totalorder %s138, %s154
      %p156 = scmp.eq.s32.totalorder %s20, 0
      %p157 = por %p155, %p156
      %p158 = scmp.le.s32.totalorder 1, %s14
      %p159 = scmp.lt.s32.totalorder %s14, 3
      %p160 = pnand %p158, %p159
      %p161 = pneg %p160
      // Predicated region
      $region9: #{down_block_forward.1} parent=5 // pred_check
        _
      $region10: #{down_block_forward.1} parent=5 // pred_check_branch
        %163 = sbr.rel (%p160) target = $region12
      $region11: #{down_block_forward.1} parent=5 // pred_region
        %s164 = ssub.s32 %s14, 1
        // Predicated region
        $region13: #{down_block_forward.1} parent=11 // pred_check
          %p165 = pneg %p61
        $region14: #{down_block_forward.1} parent=11 // pred_check_branch
          %167 = sbr.rel (%p165) target = $region16
        $region15: #{down_block_forward.1} parent=11 // pred_region
          _
        $region16: #{down_block_forward.1} parent=11 // pred_fallthru
          _
        // Predicated region
        $region17: #{down_block_forward.1} parent=11 // pred_check
          %p168 = pneg %p82
        $region18: #{down_block_forward.1} parent=11 // pred_check_branch
          %170 = sbr.rel (%p168) target = $region20
        $region19: #{down_block_forward.1} parent=11 // pred_region
          _
        $region20: #{down_block_forward.1} parent=11 // pred_fallthru
          _
        // Predicated region
        $region21: #{down_block_forward.1} parent=11 // pred_check
          %p171 = pneg %p103
        $region22: #{down_block_forward.1} parent=11 // pred_check_branch
          %173 = sbr.rel (%p171) target = $region24
        $region23: #{down_block_forward.1} parent=11 // pred_region
          _
        $region24: #{down_block_forward.1} parent=11 // pred_fallthru
          _
        // Predicated region
        $region25: #{down_block_forward.1} parent=11 // pred_check
          %p174 = pneg %p124
        $region26: #{down_block_forward.1} parent=11 // pred_check_branch
          %176 = sbr.rel (%p174) target = $region28
        $region27: #{down_block_forward.1} parent=11 // pred_region
          _
        $region28: #{down_block_forward.1} parent=11 // pred_fallthru
          _
      $region12: #{down_block_forward.1} parent=5 // pred_fallthru
        _
      %p177 = scmp.lt.s32.totalorder %s14, 2
      // Predicated region
      $region29: #{down_block_forward.1} parent=5 // pred_check
        %p178 = pneg %p177
      $region30: #{down_block_forward.1} parent=5 // pred_check_branch
        %180 = sbr.rel (%p178) target = $region32
      $region31: #{down_block_forward.1} parent=5 // pred_region
        // Predicated region
        $region33: #{down_block_forward.1} parent=31 // pred_check
          %p181 = pneg %p34
        $region34: #{down_block_forward.1} parent=31 // pred_check_branch
          %183 = sbr.rel (%p181) target = $region36
        $region35: #{down_block_forward.1} parent=31 // pred_region
          %p184 = scmp.lt.s32.totalorder %s14, 1
          %s185 = scalar_select %p184, %s14, 1
          %s186 = smul.addr %s185, 20
          %s187 = smul.addr %s186, 4
          %s188 = scalar_lea.vmem %s0, %s187
        $region36: #{down_block_forward.1} parent=31 // pred_fallthru
          _
      $region32: #{down_block_forward.1} parent=5 // pred_fallthru
        _
      %p189 = scmp.le.s32.totalorder 1, %s14
      %p190 = scmp.lt.s32.totalorder %s14, 3
      %p191 = pnand %p189, %p190
      %p192 = pneg %p191
      // Predicated region
      $region37: #{down_block_forward.1} parent=5 // pred_check
        _
      $region38: #{down_block_forward.1} parent=5 // pred_check_branch
        %194 = sbr.rel (%p191) target = $region40
      $region39: #{down_block_forward.1} parent=5 // pred_region
        %s195 = ssub.s32 %s14, 1
        %p196 = scmp.lt.s32.totalorder %s19, 1
        %s197 = scalar_select %p196, %s19, 1
        %s198 = smul.addr %s197, 20
        %s199 = smul.addr %s198, 4
        %s200 = scalar_lea.vmem %s0, %s199
        %p201 = pneg %p40
        %p202 = pneg %p37
        %p203 = pneg %p61
        %p204 = pneg %p58
        %p205 = pneg %p82
        %p206 = pneg %p79
        %p207 = pneg %p103
        %p208 = pneg %p100
        %p209 = pneg %p124
        %p210 = pneg %p121
        %p211 = pneg %p150
        %p212 = pneg %p147
        %s213 = sand.u32 %s137, 1
        %s214 = scalar_lea.sflag [#allocation4], %s213
        %s215 = sand.u32 %s137, 1
        %s216 = smul.addr %s215, 64
        %s217 = scalar_lea.vmem [#allocation3], %s216
        %p218 = scmp.lt.s32.totalorder %s19, 1
        %s219 = scalar_select %p218, %s19, 1
        %s220 = smul.addr %s219, 20
        %s221 = smul.addr %s220, 4
        %s222 = scalar_lea.vmem %s0, %s221
        %v224 = vld [vmem:[%s222] sm:$0xf]
        %v225 = vld [vmem:[%s222 + $0x8] sm:$0xf]
        %v226 = vld [vmem:[%s222 + $0x10] sm:$0xf]
        %v227 = vld [vmem:[%s222 + $0x18] sm:$0xf]
        %v228 = vld [vmem:[%s222 + $0x20] sm:$0xf]
        %v229 = vld [vmem:[%s222 + $0x28] sm:$0xf]
        %v230 = vld [vmem:[%s222 + $0x30] sm:$0xf]
        %v231 = vld [vmem:[%s222 + $0x38] sm:$0xf]
        %v232 = vld [vmem:[%s1] sm:$0xf]
        %v233 = vld [vmem:[%s1 + $0x4] sm:$0xf]
        %v234 = vld [vmem:[%s1 + $0x8] sm:$0xf]
        %v235 = vld [vmem:[%s1 + $0xc] sm:$0xf]
        %v236 = vld [vmem:[%s222 + $0x4] sm:$0x1]
        %v237 = vld [vmem:[%s222 + $0xc] sm:$0x1]
        %v238 = vld [vmem:[%s222 + $0x14] sm:$0x1]
        %v239 = vld [vmem:[%s222 + $0x1c] sm:$0x1]
        %v240 = vld [vmem:[%s222 + $0x24] sm:$0x1]
        %v241 = vld [vmem:[%s222 + $0x2c] sm:$0x1]
        %v242 = vld [vmem:[%s222 + $0x34] sm:$0x1]
        %v243 = vld [vmem:[%s222 + $0x3c] sm:$0x1]
        %vm244 = vsmask.f32 3328
        %vm245 = vsmask.f32 7440
        %vm246 = vmor %vm244, %vm245
        %v248 = vshrl.u32 %v224, 16
        %v250 = vrot.slane %v248, 4
        %v251 = vshll.u32 %v224, 16
        %v253 = vrot.slane %v251, 5
        %v254 = vor.u32 %v250, %v253
        %v255 = vrot.slane %v254, 4
        %v257 = vshll.u32 %v236, 16
        %v259 = vrot.slane %v257, 5
        %v260 = vsel %vm246, %v255, %v259
        %v262 = vshrl.u32 %v225, 16
        %v264 = vrot.slane %v262, 4
        %v265 = vshll.u32 %v225, 16
        %v267 = vrot.slane %v265, 5
        %v268 = vor.u32 %v264, %v267
        %v269 = vrot.slane %v268, 4
        %v271 = vshll.u32 %v237, 16
        %v273 = vrot.slane %v271, 5
        %v274 = vsel %vm246, %v269, %v273
        %v276 = vshrl.u32 %v226, 16
        %v278 = vrot.slane %v276, 4
        %v279 = vshll.u32 %v226, 16
        %v281 = vrot.slane %v279, 5
        %v282 = vor.u32 %v278, %v281
        %v283 = vrot.slane %v282, 4
        %v285 = vshll.u32 %v238, 16
        %v287 = vrot.slane %v285, 5
        %v288 = vsel %vm246, %v283, %v287
        %v290 = vshrl.u32 %v227, 16
        %v292 = vrot.slane %v290, 4
        %v293 = vshll.u32 %v227, 16
        %v295 = vrot.slane %v293, 5
        %v296 = vor.u32 %v292, %v295
        %v297 = vrot.slane %v296, 4
        %v299 = vshll.u32 %v239, 16
        %v301 = vrot.slane %v299, 5
        %v302 = vsel %vm246, %v297, %v301
        %v304 = vshrl.u32 %v228, 16
        %v306 = vrot.slane %v304, 4
        %v307 = vshll.u32 %v228, 16
        %v309 = vrot.slane %v307, 5
        %v310 = vor.u32 %v306, %v309
        %v311 = vrot.slane %v310, 4
        %v313 = vshll.u32 %v240, 16
        %v315 = vrot.slane %v313, 5
        %v316 = vsel %vm246, %v311, %v315
        %v318 = vshrl.u32 %v229, 16
        %v320 = vrot.slane %v318, 4
        %v321 = vshll.u32 %v229, 16
        %v323 = vrot.slane %v321, 5
        %v324 = vor.u32 %v320, %v323
        %v325 = vrot.slane %v324, 4
        %v327 = vshll.u32 %v241, 16
        %v329 = vrot.slane %v327, 5
        %v330 = vsel %vm246, %v325, %v329
        %v332 = vshrl.u32 %v230, 16
        %v334 = vrot.slane %v332, 4
        %v335 = vshll.u32 %v230, 16
        %v337 = vrot.slane %v335, 5
        %v338 = vor.u32 %v334, %v337
        %v339 = vrot.slane %v338, 4
        %v341 = vshll.u32 %v242, 16
        %v343 = vrot.slane %v341, 5
        %v344 = vsel %vm246, %v339, %v343
        %v346 = vshrl.u32 %v231, 16
        %v348 = vrot.slane %v346, 4
        %v349 = vshll.u32 %v231, 16
        %v351 = vrot.slane %v349, 5
        %v352 = vor.u32 %v348, %v351
        %v353 = vrot.slane %v352, 4
        %v355 = vshll.u32 %v243, 16
        %v357 = vrot.slane %v355, 5
        %v358 = vsel %vm246, %v353, %v357
        %s359 = scalar_lea.vmem %s1, 16
        %v360 = vld [vmem:[%s359] sm:$0xf]
        %v361 = vld [vmem:[%s359 + $0x4] sm:$0xf]
        %v362 = vld [vmem:[%s359 + $0x8] sm:$0xf]
        %v363 = vld [vmem:[%s359 + $0xc] sm:$0xf]
        %v364 = vunpack.c.l.b16 %v260
        %v365 = vunpack.c.l.b16 %v274
        %v366 = vunpack.c.l.b16 %v288
        %v367 = vunpack.c.l.b16 %v302
        %v368 = vunpack.c.l.b16 %v316
        %v369 = vunpack.c.l.b16 %v330
        %v370 = vunpack.c.l.b16 %v344
        %v371 = vunpack.c.l.b16 %v358
        %v372 = vpack.c.b16 %v365, %v364
        %v373 = vpack.c.b16 %v367, %v366
        %v374 = vpack.c.b16 %v369, %v368
        %v375 = vpack.c.b16 %v371, %v370
        %v380 = vunpack.c.l.b16 %v360
        %v381 = vunpack.c.l.b16 %v361
        %v382 = vunpack.c.l.b16 %v362
        %v383 = vunpack.c.l.b16 %v363
        %v384 = vpack.c.b16 %v381, %v380
        %v385 = vpack.c.b16 %v383, %v382
        %vm388 = vcmask 261120
        %v390 = vsel %vm388, %v372, 0
        %v393 = vsel %vm388, %v373, 0
        %v396 = vsel %vm388, %v374, 0
        %v399 = vsel %vm388, %v375, 0
        %401 = vmatpush.bf16.msra.mxu0 0
        %402 = vmatpush.bf16.msra.mxu0 0
        %403 = vmatpush.bf16.msra.mxu0 0
        %404 = vmatpush.bf16.msra.mxu0 0
        %405 = vmatpush.bf16.msra.mxu0 0
        %406 = vmatpush.bf16.msra.mxu0 0
        %407 = vmatpush.bf16.msra.mxu0 %v385
        %408 = vmatpush.bf16.msra.mxu0 %v384
        %409 = vmatmul.bf16.gmra.mxu0 %v390
        %v410 = vpop.f32.mrf.mxu0
        %v411 = vadd.f32 0.0, %v410
        %v412 = vpop.f32.mrf.mxu0
        %v413 = vadd.f32 0.0, %v412
        %414 = vmatmul.bf16.gmra.mxu0 %v393
        %v415 = vpop.f32.mrf.mxu0
        %v416 = vadd.f32 0.0, %v415
        %v417 = vpop.f32.mrf.mxu0
        %v418 = vadd.f32 0.0, %v417
        %419 = vmatmul.bf16.gmra.mxu0 %v396
        %v420 = vpop.f32.mrf.mxu0
        %v421 = vadd.f32 0.0, %v420
        %v422 = vpop.f32.mrf.mxu0
        %v423 = vadd.f32 0.0, %v422
        %424 = vmatmul.bf16.gmra.mxu0 %v399
        %v425 = vpop.f32.mrf.mxu0
        %v426 = vadd.f32 0.0, %v425
        %v427 = vpop.f32.mrf.mxu0
        %v428 = vadd.f32 0.0, %v427
        %429 = vdwg.mxu0
        %v438 = vunpack.c.l.b16 %v224
        %v439 = vunpack.c.l.b16 %v225
        %v440 = vunpack.c.l.b16 %v226
        %v441 = vunpack.c.l.b16 %v227
        %v442 = vunpack.c.l.b16 %v228
        %v443 = vunpack.c.l.b16 %v229
        %v444 = vunpack.c.l.b16 %v230
        %v445 = vunpack.c.l.b16 %v231
        %v446 = vpack.c.b16 %v439, %v438
        %v447 = vpack.c.b16 %v441, %v440
        %v448 = vpack.c.b16 %v443, %v442
        %v449 = vpack.c.b16 %v445, %v444
        %v454 = vunpack.c.l.b16 %v232
        %v455 = vunpack.c.l.b16 %v233
        %v456 = vunpack.c.l.b16 %v234
        %v457 = vunpack.c.l.b16 %v235
        %v458 = vpack.c.b16 %v455, %v454
        %v459 = vpack.c.b16 %v457, %v456
        %v463 = vsel %vm388, %v446, 0
        %v466 = vsel %vm388, %v447, 0
        %v469 = vsel %vm388, %v448, 0
        %v472 = vsel %vm388, %v449, 0
        %474 = vmatpush.bf16.msra.mxu0 0
        %475 = vmatpush.bf16.msra.mxu0 0
        %476 = vmatpush.bf16.msra.mxu0 0
        %477 = vmatpush.bf16.msra.mxu0 0
        %478 = vmatpush.bf16.msra.mxu0 0
        %479 = vmatpush.bf16.msra.mxu0 0
        %480 = vmatpush.bf16.msra.mxu0 %v459
        %481 = vmatpush.bf16.msra.mxu0 %v458
        %482 = vmatmul.bf16.gmra.mxu0 %v463
        %v483 = vpop.f32.mrf.mxu0
        %v484 = vadd.f32 %v411, %v483
        %v485 = vpop.f32.mrf.mxu0
        %v486 = vadd.f32 %v413, %v485
        %487 = vmatmul.bf16.gmra.mxu0 %v466
        %v488 = vpop.f32.mrf.mxu0
        %v489 = vadd.f32 %v416, %v488
        %v490 = vpop.f32.mrf.mxu0
        %v491 = vadd.f32 %v418, %v490
        %492 = vmatmul.bf16.gmra.mxu0 %v469
        %v493 = vpop.f32.mrf.mxu0
        %v494 = vadd.f32 %v421, %v493
        %v495 = vpop.f32.mrf.mxu0
        %v496 = vadd.f32 %v423, %v495
        %497 = vmatmul.bf16.gmra.mxu0 %v472
        %v498 = vpop.f32.mrf.mxu0
        %v499 = vadd.f32 %v426, %v498
        %v500 = vpop.f32.mrf.mxu0
        %v501 = vadd.f32 %v428, %v500
        %502 = vdwg.mxu0
        %v503 = vld [vmem:[%s222] sm:$0xe]
        %v504 = vld [vmem:[%s222 + $0x8] sm:$0xe]
        %v505 = vld [vmem:[%s222 + $0x10] sm:$0xe]
        %v506 = vld [vmem:[%s222 + $0x18] sm:$0xe]
        %v507 = vld [vmem:[%s222 + $0x20] sm:$0xe]
        %v508 = vld [vmem:[%s222 + $0x28] sm:$0xe]
        %v509 = vld [vmem:[%s222 + $0x30] sm:$0xe]
        %v510 = vld [vmem:[%s222 + $0x38] sm:$0xe]
        %vm527 = vcmask 1042432
        %vm528 = vcmask 1046532
        %vm529 = vmor %vm527, %vm528
        %v530 = vrot.slane %v503, 5
        %v531 = vrot.slane %v530, 4
        %v532 = vrot.slane %v236, 5
        %v533 = vsel %vm529, %v531, %v532
        %v534 = vrot.slane %v504, 5
        %v535 = vrot.slane %v534, 4
        %v536 = vrot.slane %v237, 5
        %v537 = vsel %vm529, %v535, %v536
        %v538 = vrot.slane %v505, 5
        %v539 = vrot.slane %v538, 4
        %v540 = vrot.slane %v238, 5
        %v541 = vsel %vm529, %v539, %v540
        %v542 = vrot.slane %v506, 5
        %v543 = vrot.slane %v542, 4
        %v544 = vrot.slane %v239, 5
        %v545 = vsel %vm529, %v543, %v544
        %v546 = vrot.slane %v507, 5
        %v547 = vrot.slane %v546, 4
        %v548 = vrot.slane %v240, 5
        %v549 = vsel %vm529, %v547, %v548
        %v550 = vrot.slane %v508, 5
        %v551 = vrot.slane %v550, 4
        %v552 = vrot.slane %v241, 5
        %v553 = vsel %vm529, %v551, %v552
        %v554 = vrot.slane %v509, 5
        %v555 = vrot.slane %v554, 4
        %v556 = vrot.slane %v242, 5
        %v557 = vsel %vm529, %v555, %v556
        %v558 = vrot.slane %v510, 5
        %v559 = vrot.slane %v558, 4
        %v560 = vrot.slane %v243, 5
        %v561 = vsel %vm529, %v559, %v560
        %s562 = scalar_lea.vmem %s1, 32
        %v563 = vld [vmem:[%s562] sm:$0xf]
        %v564 = vld [vmem:[%s562 + $0x4] sm:$0xf]
        %v565 = vld [vmem:[%s562 + $0x8] sm:$0xf]
        %v566 = vld [vmem:[%s562 + $0xc] sm:$0xf]
        %v567 = vunpack.c.l.b16 %v533
        %v568 = vunpack.c.l.b16 %v537
        %v569 = vunpack.c.l.b16 %v541
        %v570 = vunpack.c.l.b16 %v545
        %v571 = vunpack.c.l.b16 %v549
        %v572 = vunpack.c.l.b16 %v553
        %v573 = vunpack.c.l.b16 %v557
        %v574 = vunpack.c.l.b16 %v561
        %v575 = vpack.c.b16 %v568, %v567
        %v576 = vpack.c.b16 %v570, %v569
        %v577 = vpack.c.b16 %v572, %v571
        %v578 = vpack.c.b16 %v574, %v573
        %v583 = vunpack.c.l.b16 %v563
        %v584 = vunpack.c.l.b16 %v564
        %v585 = vunpack.c.l.b16 %v565
        %v586 = vunpack.c.l.b16 %v566
        %v587 = vpack.c.b16 %v584, %v583
        %v588 = vpack.c.b16 %v586, %v585
        %v592 = vsel %vm388, %v575, 0
        %v595 = vsel %vm388, %v576, 0
        %v598 = vsel %vm388, %v577, 0
        %v601 = vsel %vm388, %v578, 0
        %603 = vmatpush.bf16.msra.mxu0 0
        %604 = vmatpush.bf16.msra.mxu0 0
        %605 = vmatpush.bf16.msra.mxu0 0
        %606 = vmatpush.bf16.msra.mxu0 0
        %607 = vmatpush.bf16.msra.mxu0 0
        %608 = vmatpush.bf16.msra.mxu0 0
        %609 = vmatpush.bf16.msra.mxu0 %v588
        %610 = vmatpush.bf16.msra.mxu0 %v587
        %611 = vmatmul.bf16.gmra.mxu0 %v592
        %v612 = vpop.f32.mrf.mxu0
        %v613 = vadd.f32 0.0, %v612
        %v614 = vpop.f32.mrf.mxu0
        %v615 = vadd.f32 0.0, %v614
        %616 = vmatmul.bf16.gmra.mxu0 %v595
        %v617 = vpop.f32.mrf.mxu0
        %v618 = vadd.f32 0.0, %v617
        %v619 = vpop.f32.mrf.mxu0
        %v620 = vadd.f32 0.0, %v619
        %621 = vmatmul.bf16.gmra.mxu0 %v598
        %v622 = vpop.f32.mrf.mxu0
        %v623 = vadd.f32 0.0, %v622
        %v624 = vpop.f32.mrf.mxu0
        %v625 = vadd.f32 0.0, %v624
        %626 = vmatmul.bf16.gmra.mxu0 %v601
        %v627 = vpop.f32.mrf.mxu0
        %v628 = vadd.f32 0.0, %v627
        %v629 = vpop.f32.mrf.mxu0
        %v630 = vadd.f32 0.0, %v629
        %631 = vdwg.mxu0
        %v632 = vadd.f32 %v484, %v613
        %v633 = vadd.f32 %v486, %v615
        %v634 = vadd.f32 %v489, %v618
        %v635 = vadd.f32 %v491, %v620
        %v636 = vadd.f32 %v494, %v623
        %v637 = vadd.f32 %v496, %v625
        %v638 = vadd.f32 %v499, %v628
        %v639 = vadd.f32 %v501, %v630
        %s640 = scalar_lea.vmem %s222, 8
        %v641 = vld [vmem:[%s640] sm:$0xf]
        %v642 = vld [vmem:[%s640 + $0x8] sm:$0xf]
        %v643 = vld [vmem:[%s640 + $0x10] sm:$0xf]
        %v644 = vld [vmem:[%s640 + $0x18] sm:$0xf]
        %v645 = vld [vmem:[%s640 + $0x20] sm:$0xf]
        %v646 = vld [vmem:[%s640 + $0x28] sm:$0xf]
        %v647 = vld [vmem:[%s640 + $0x30] sm:$0xf]
        %v648 = vld [vmem:[%s640 + $0x38] sm:$0xf]
        %s649 = scalar_lea.vmem %s1, 48
        %v650 = vld [vmem:[%s649] sm:$0xf]
        %v651 = vld [vmem:[%s649 + $0x4] sm:$0xf]
        %v652 = vld [vmem:[%s649 + $0x8] sm:$0xf]
        %v653 = vld [vmem:[%s649 + $0xc] sm:$0xf]
        %v662 = vunpack.c.l.b16 %v641
        %v663 = vunpack.c.l.b16 %v642
        %v664 = vunpack.c.l.b16 %v643
        %v665 = vunpack.c.l.b16 %v644
        %v666 = vunpack.c.l.b16 %v645
        %v667 = vunpack.c.l.b16 %v646
        %v668 = vunpack.c.l.b16 %v647
        %v669 = vunpack.c.l.b16 %v648
        %v670 = vpack.c.b16 %v663, %v662
        %v671 = vpack.c.b16 %v665, %v664
        %v672 = vpack.c.b16 %v667, %v666
        %v673 = vpack.c.b16 %v669, %v668
        %v678 = vunpack.c.l.b16 %v650
        %v679 = vunpack.c.l.b16 %v651
        %v680 = vunpack.c.l.b16 %v652
        %v681 = vunpack.c.l.b16 %v653
        %v682 = vpack.c.b16 %v679, %v678
        %v683 = vpack.c.b16 %v681, %v680
        %v687 = vsel %vm388, %v670, 0
        %v690 = vsel %vm388, %v671, 0
        %v693 = vsel %vm388, %v672, 0
        %v696 = vsel %vm388, %v673, 0
        %698 = vmatpush.bf16.msra.mxu0 0
        %699 = vmatpush.bf16.msra.mxu0 0
        %700 = vmatpush.bf16.msra.mxu0 0
        %701 = vmatpush.bf16.msra.mxu0 0
        %702 = vmatpush.bf16.msra.mxu0 0
        %703 = vmatpush.bf16.msra.mxu0 0
        %704 = vmatpush.bf16.msra.mxu0 %v683
        %705 = vmatpush.bf16.msra.mxu0 %v682
        %706 = vmatmul.bf16.gmra.mxu0 %v687
        %v707 = vpop.f32.mrf.mxu0
        %v708 = vadd.f32 0.0, %v707
        %v709 = vpop.f32.mrf.mxu0
        %v710 = vadd.f32 0.0, %v709
        %711 = vmatmul.bf16.gmra.mxu0 %v690
        %v712 = vpop.f32.mrf.mxu0
        %v713 = vadd.f32 0.0, %v712
        %v714 = vpop.f32.mrf.mxu0
        %v715 = vadd.f32 0.0, %v714
        %716 = vmatmul.bf16.gmra.mxu0 %v693
        %v717 = vpop.f32.mrf.mxu0
        %v718 = vadd.f32 0.0, %v717
        %v719 = vpop.f32.mrf.mxu0
        %v720 = vadd.f32 0.0, %v719
        %721 = vmatmul.bf16.gmra.mxu0 %v696
        %v722 = vpop.f32.mrf.mxu0
        %v723 = vadd.f32 0.0, %v722
        %v724 = vpop.f32.mrf.mxu0
        %v725 = vadd.f32 0.0, %v724
        %726 = vdwg.mxu0
        %v727 = vadd.f32 %v632, %v708
        %v728 = vadd.f32 %v633, %v710
        %v729 = vadd.f32 %v634, %v713
        %v730 = vadd.f32 %v635, %v715
        %v731 = vadd.f32 %v636, %v718
        %v732 = vadd.f32 %v637, %v720
        %v733 = vadd.f32 %v638, %v723
        %v734 = vadd.f32 %v639, %v725
        %v735 = vld [vmem:[%s640] sm:$0xf]
        %v736 = vld [vmem:[%s640 + $0x4] sm:$0x1]
        %v737 = vld [vmem:[%s640 + $0x8] sm:$0xf]
        %v738 = vld [vmem:[%s640 + $0xc] sm:$0x1]
        %v739 = vld [vmem:[%s640 + $0x10] sm:$0xf]
        %v740 = vld [vmem:[%s640 + $0x14] sm:$0x1]
        %v741 = vld [vmem:[%s640 + $0x18] sm:$0xf]
        %v742 = vld [vmem:[%s640 + $0x1c] sm:$0x1]
        %v743 = vld [vmem:[%s640 + $0x20] sm:$0xf]
        %v744 = vld [vmem:[%s640 + $0x24] sm:$0x1]
        %v745 = vld [vmem:[%s640 + $0x28] sm:$0xf]
        %v746 = vld [vmem:[%s640 + $0x2c] sm:$0x1]
        %v747 = vld [vmem:[%s640 + $0x30] sm:$0xf]
        %v748 = vld [vmem:[%s640 + $0x34] sm:$0x1]
        %v749 = vld [vmem:[%s640 + $0x38] sm:$0xf]
        %v750 = vld [vmem:[%s640 + $0x3c] sm:$0x1]
        %v752 = vshrl.u32 %v735, 16
        %v754 = vrot.slane %v752, 4
        %v755 = vshll.u32 %v735, 16
        %v757 = vrot.slane %v755, 5
        %v758 = vor.u32 %v754, %v757
        %v759 = vrot.slane %v758, 4
        %v761 = vshll.u32 %v736, 16
        %v763 = vrot.slane %v761, 5
        %v764 = vsel %vm246, %v759, %v763
        %v766 = vshrl.u32 %v737, 16
        %v768 = vrot.slane %v766, 4
        %v769 = vshll.u32 %v737, 16
        %v771 = vrot.slane %v769, 5
        %v772 = vor.u32 %v768, %v771
        %v773 = vrot.slane %v772, 4
        %v775 = vshll.u32 %v738, 16
        %v777 = vrot.slane %v775, 5
        %v778 = vsel %vm246, %v773, %v777
        %v780 = vshrl.u32 %v739, 16
        %v782 = vrot.slane %v780, 4
        %v783 = vshll.u32 %v739, 16
        %v785 = vrot.slane %v783, 5
        %v786 = vor.u32 %v782, %v785
        %v787 = vrot.slane %v786, 4
        %v789 = vshll.u32 %v740, 16
        %v791 = vrot.slane %v789, 5
        %v792 = vsel %vm246, %v787, %v791
        %v794 = vshrl.u32 %v741, 16
        %v796 = vrot.slane %v794, 4
        %v797 = vshll.u32 %v741, 16
        %v799 = vrot.slane %v797, 5
        %v800 = vor.u32 %v796, %v799
        %v801 = vrot.slane %v800, 4
        %v803 = vshll.u32 %v742, 16
        %v805 = vrot.slane %v803, 5
        %v806 = vsel %vm246, %v801, %v805
        %v808 = vshrl.u32 %v743, 16
        %v810 = vrot.slane %v808, 4
        %v811 = vshll.u32 %v743, 16
        %v813 = vrot.slane %v811, 5
        %v814 = vor.u32 %v810, %v813
        %v815 = vrot.slane %v814, 4
        %v817 = vshll.u32 %v744, 16
        %v819 = vrot.slane %v817, 5
        %v820 = vsel %vm246, %v815, %v819
        %v822 = vshrl.u32 %v745, 16
        %v824 = vrot.slane %v822, 4
        %v825 = vshll.u32 %v745, 16
        %v827 = vrot.slane %v825, 5
        %v828 = vor.u32 %v824, %v827
        %v829 = vrot.slane %v828, 4
        %v831 = vshll.u32 %v746, 16
        %v833 = vrot.slane %v831, 5
        %v834 = vsel %vm246, %v829, %v833
        %v836 = vshrl.u32 %v747, 16
        %v838 = vrot.slane %v836, 4
        %v839 = vshll.u32 %v747, 16
        %v841 = vrot.slane %v839, 5
        %v842 = vor.u32 %v838, %v841
        %v843 = vrot.slane %v842, 4
        %v845 = vshll.u32 %v748, 16
        %v847 = vrot.slane %v845, 5
        %v848 = vsel %vm246, %v843, %v847
        %v850 = vshrl.u32 %v749, 16
        %v852 = vrot.slane %v850, 4
        %v853 = vshll.u32 %v749, 16
        %v855 = vrot.slane %v853, 5
        %v856 = vor.u32 %v852, %v855
        %v857 = vrot.slane %v856, 4
        %v859 = vshll.u32 %v750, 16
        %v861 = vrot.slane %v859, 5
        %v862 = vsel %vm246, %v857, %v861
        %s863 = scalar_lea.vmem %s1, 64
        %v864 = vld [vmem:[%s863] sm:$0xf]
        %v865 = vld [vmem:[%s863 + $0x4] sm:$0xf]
        %v866 = vld [vmem:[%s863 + $0x8] sm:$0xf]
        %v867 = vld [vmem:[%s863 + $0xc] sm:$0xf]
        %v868 = vunpack.c.l.b16 %v764
        %v869 = vunpack.c.l.b16 %v778
        %v870 = vunpack.c.l.b16 %v792
        %v871 = vunpack.c.l.b16 %v806
        %v872 = vunpack.c.l.b16 %v820
        %v873 = vunpack.c.l.b16 %v834
        %v874 = vunpack.c.l.b16 %v848
        %v875 = vunpack.c.l.b16 %v862
        %v876 = vpack.c.b16 %v869, %v868
        %v877 = vpack.c.b16 %v871, %v870
        %v878 = vpack.c.b16 %v873, %v872
        %v879 = vpack.c.b16 %v875, %v874
        %v884 = vunpack.c.l.b16 %v864
        %v885 = vunpack.c.l.b16 %v865
        %v886 = vunpack.c.l.b16 %v866
        %v887 = vunpack.c.l.b16 %v867
        %v888 = vpack.c.b16 %v885, %v884
        %v889 = vpack.c.b16 %v887, %v886
        %v893 = vsel %vm388, %v876, 0
        %v896 = vsel %vm388, %v877, 0
        %v899 = vsel %vm388, %v878, 0
        %v902 = vsel %vm388, %v879, 0
        %904 = vmatpush.bf16.msra.mxu0 0
        %905 = vmatpush.bf16.msra.mxu0 0
        %906 = vmatpush.bf16.msra.mxu0 0
        %907 = vmatpush.bf16.msra.mxu0 0
        %908 = vmatpush.bf16.msra.mxu0 0
        %909 = vmatpush.bf16.msra.mxu0 0
        %910 = vmatpush.bf16.msra.mxu0 %v889
        %911 = vmatpush.bf16.msra.mxu0 %v888
        %912 = vmatmul.bf16.gmra.mxu0 %v893
        %v913 = vpop.f32.mrf.mxu0
        %v914 = vadd.f32 0.0, %v913
        %v915 = vpop.f32.mrf.mxu0
        %v916 = vadd.f32 0.0, %v915
        %917 = vmatmul.bf16.gmra.mxu0 %v896
        %v918 = vpop.f32.mrf.mxu0
        %v919 = vadd.f32 0.0, %v918
        %v920 = vpop.f32.mrf.mxu0
        %v921 = vadd.f32 0.0, %v920
        %922 = vmatmul.bf16.gmra.mxu0 %v899
        %v923 = vpop.f32.mrf.mxu0
        %v924 = vadd.f32 0.0, %v923
        %v925 = vpop.f32.mrf.mxu0
        %v926 = vadd.f32 0.0, %v925
        %927 = vmatmul.bf16.gmra.mxu0 %v902
        %v928 = vpop.f32.mrf.mxu0
        %v929 = vadd.f32 0.0, %v928
        %v930 = vpop.f32.mrf.mxu0
        %v931 = vadd.f32 0.0, %v930
        %932 = vdwg.mxu0
        %v933 = vadd.f32 %v727, %v914
        %v934 = vadd.f32 %v728, %v916
        %v935 = vadd.f32 %v729, %v919
        %v936 = vadd.f32 %v730, %v921
        %v937 = vadd.f32 %v731, %v924
        %v938 = vadd.f32 %v732, %v926
        %v939 = vadd.f32 %v733, %v929
        %v940 = vadd.f32 %v734, %v931
        %v941 = vld [vmem:[%s640] sm:$0xe]
        %v942 = vld [vmem:[%s640 + $0x8] sm:$0xe]
        %v943 = vld [vmem:[%s640 + $0x10] sm:$0xe]
        %v944 = vld [vmem:[%s640 + $0x18] sm:$0xe]
        %v945 = vld [vmem:[%s640 + $0x20] sm:$0xe]
        %v946 = vld [vmem:[%s640 + $0x28] sm:$0xe]
        %v947 = vld [vmem:[%s640 + $0x30] sm:$0xe]
        %v948 = vld [vmem:[%s640 + $0x38] sm:$0xe]
        %v965 = vrot.slane %v941, 5
        %v966 = vrot.slane %v965, 4
        %v967 = vrot.slane %v736, 5
        %v968 = vsel %vm529, %v966, %v967
        %v969 = vrot.slane %v942, 5
        %v970 = vrot.slane %v969, 4
        %v971 = vrot.slane %v738, 5
        %v972 = vsel %vm529, %v970, %v971
        %v973 = vrot.slane %v943, 5
        %v974 = vrot.slane %v973, 4
        %v975 = vrot.slane %v740, 5
        %v976 = vsel %vm529, %v974, %v975
        %v977 = vrot.slane %v944, 5
        %v978 = vrot.slane %v977, 4
        %v979 = vrot.slane %v742, 5
        %v980 = vsel %vm529, %v978, %v979
        %v981 = vrot.slane %v945, 5
        %v982 = vrot.slane %v981, 4
        %v983 = vrot.slane %v744, 5
        %v984 = vsel %vm529, %v982, %v983
        %v985 = vrot.slane %v946, 5
        %v986 = vrot.slane %v985, 4
        %v987 = vrot.slane %v746, 5
        %v988 = vsel %vm529, %v986, %v987
        %v989 = vrot.slane %v947, 5
        %v990 = vrot.slane %v989, 4
        %v991 = vrot.slane %v748, 5
        %v992 = vsel %vm529, %v990, %v991
        %v993 = vrot.slane %v948, 5
        %v994 = vrot.slane %v993, 4
        %v995 = vrot.slane %v750, 5
        %v996 = vsel %vm529, %v994, %v995
        %s997 = scalar_lea.vmem %s1, 80
        %v998 = vld [vmem:[%s997] sm:$0xf]
        %v999 = vld [vmem:[%s997 + $0x4] sm:$0xf]
        %v1000 = vld [vmem:[%s997 + $0x8] sm:$0xf]
        %v1001 = vld [vmem:[%s997 + $0xc] sm:$0xf]
        %v1002 = vunpack.c.l.b16 %v968
        %v1003 = vunpack.c.l.b16 %v972
        %v1004 = vunpack.c.l.b16 %v976
        %v1005 = vunpack.c.l.b16 %v980
        %v1006 = vunpack.c.l.b16 %v984
        %v1007 = vunpack.c.l.b16 %v988
        %v1008 = vunpack.c.l.b16 %v992
        %v1009 = vunpack.c.l.b16 %v996
        %v1010 = vpack.c.b16 %v1003, %v1002
        %v1011 = vpack.c.b16 %v1005, %v1004
        %v1012 = vpack.c.b16 %v1007, %v1006
        %v1013 = vpack.c.b16 %v1009, %v1008
        %v1018 = vunpack.c.l.b16 %v998
        %v1019 = vunpack.c.l.b16 %v999
        %v1020 = vunpack.c.l.b16 %v1000
        %v1021 = vunpack.c.l.b16 %v1001
        %v1022 = vpack.c.b16 %v1019, %v1018
        %v1023 = vpack.c.b16 %v1021, %v1020
        %v1027 = vsel %vm388, %v1010, 0
        %v1030 = vsel %vm388, %v1011, 0
        %v1033 = vsel %vm388, %v1012, 0
        %v1036 = vsel %vm388, %v1013, 0
        %1038 = vmatpush.bf16.msra.mxu0 0
        %1039 = vmatpush.bf16.msra.mxu0 0
        %1040 = vmatpush.bf16.msra.mxu0 0
        %1041 = vmatpush.bf16.msra.mxu0 0
        %1042 = vmatpush.bf16.msra.mxu0 0
        %1043 = vmatpush.bf16.msra.mxu0 0
        %1044 = vmatpush.bf16.msra.mxu0 %v1023
        %1045 = vmatpush.bf16.msra.mxu0 %v1022
        %1046 = vmatmul.bf16.gmra.mxu0 %v1027
        %v1047 = vpop.f32.mrf.mxu0
        %v1048 = vadd.f32 0.0, %v1047
        %v1049 = vpop.f32.mrf.mxu0
        %v1050 = vadd.f32 0.0, %v1049
        %1051 = vmatmul.bf16.gmra.mxu0 %v1030
        %v1052 = vpop.f32.mrf.mxu0
        %v1053 = vadd.f32 0.0, %v1052
        %v1054 = vpop.f32.mrf.mxu0
        %v1055 = vadd.f32 0.0, %v1054
        %1056 = vmatmul.bf16.gmra.mxu0 %v1033
        %v1057 = vpop.f32.mrf.mxu0
        %v1058 = vadd.f32 0.0, %v1057
        %v1059 = vpop.f32.mrf.mxu0
        %v1060 = vadd.f32 0.0, %v1059
        %1061 = vmatmul.bf16.gmra.mxu0 %v1036
        %v1062 = vpop.f32.mrf.mxu0
        %v1063 = vadd.f32 0.0, %v1062
        %v1064 = vpop.f32.mrf.mxu0
        %v1065 = vadd.f32 0.0, %v1064
        %1066 = vdwg.mxu0
        %v1067 = vadd.f32 %v933, %v1048
        %v1068 = vadd.f32 %v934, %v1050
        %v1069 = vadd.f32 %v935, %v1053
        %v1070 = vadd.f32 %v936, %v1055
        %v1071 = vadd.f32 %v937, %v1058
        %v1072 = vadd.f32 %v938, %v1060
        %v1073 = vadd.f32 %v939, %v1063
        %v1074 = vadd.f32 %v940, %v1065
        %s1075 = scalar_lea.vmem %s222, 16
        %v1076 = vld [vmem:[%s1075] sm:$0xf]
        %v1077 = vld [vmem:[%s1075 + $0x8] sm:$0xf]
        %v1078 = vld [vmem:[%s1075 + $0x10] sm:$0xf]
        %v1079 = vld [vmem:[%s1075 + $0x18] sm:$0xf]
        %v1080 = vld [vmem:[%s1075 + $0x20] sm:$0xf]
        %v1081 = vld [vmem:[%s1075 + $0x28] sm:$0xf]
        %v1082 = vld [vmem:[%s1075 + $0x30] sm:$0xf]
        %v1083 = vld [vmem:[%s1075 + $0x38] sm:$0xf]
        %s1084 = scalar_lea.vmem %s1, 96
        %v1085 = vld [vmem:[%s1084] sm:$0xf]
        %v1086 = vld [vmem:[%s1084 + $0x4] sm:$0xf]
        %v1087 = vld [vmem:[%s1084 + $0x8] sm:$0xf]
        %v1088 = vld [vmem:[%s1084 + $0xc] sm:$0xf]
        %v1097 = vunpack.c.l.b16 %v1076
        %v1098 = vunpack.c.l.b16 %v1077
        %v1099 = vunpack.c.l.b16 %v1078
        %v1100 = vunpack.c.l.b16 %v1079
        %v1101 = vunpack.c.l.b16 %v1080
        %v1102 = vunpack.c.l.b16 %v1081
        %v1103 = vunpack.c.l.b16 %v1082
        %v1104 = vunpack.c.l.b16 %v1083
        %v1105 = vpack.c.b16 %v1098, %v1097
        %v1106 = vpack.c.b16 %v1100, %v1099
        %v1107 = vpack.c.b16 %v1102, %v1101
        %v1108 = vpack.c.b16 %v1104, %v1103
        %v1113 = vunpack.c.l.b16 %v1085
        %v1114 = vunpack.c.l.b16 %v1086
        %v1115 = vunpack.c.l.b16 %v1087
        %v1116 = vunpack.c.l.b16 %v1088
        %v1117 = vpack.c.b16 %v1114, %v1113
        %v1118 = vpack.c.b16 %v1116, %v1115
        %v1122 = vsel %vm388, %v1105, 0
        %v1125 = vsel %vm388, %v1106, 0
        %v1128 = vsel %vm388, %v1107, 0
        %v1131 = vsel %vm388, %v1108, 0
        %1133 = vmatpush.bf16.msra.mxu0 0
        %1134 = vmatpush.bf16.msra.mxu0 0
        %1135 = vmatpush.bf16.msra.mxu0 0
        %1136 = vmatpush.bf16.msra.mxu0 0
        %1137 = vmatpush.bf16.msra.mxu0 0
        %1138 = vmatpush.bf16.msra.mxu0 0
        %1139 = vmatpush.bf16.msra.mxu0 %v1118
        %1140 = vmatpush.bf16.msra.mxu0 %v1117
        %1141 = vmatmul.bf16.gmra.mxu0 %v1122
        %v1142 = vpop.f32.mrf.mxu0
        %v1143 = vadd.f32 0.0, %v1142
        %v1144 = vpop.f32.mrf.mxu0
        %v1145 = vadd.f32 0.0, %v1144
        %1146 = vmatmul.bf16.gmra.mxu0 %v1125
        %v1147 = vpop.f32.mrf.mxu0
        %v1148 = vadd.f32 0.0, %v1147
        %v1149 = vpop.f32.mrf.mxu0
        %v1150 = vadd.f32 0.0, %v1149
        %1151 = vmatmul.bf16.gmra.mxu0 %v1128
        %v1152 = vpop.f32.mrf.mxu0
        %v1153 = vadd.f32 0.0, %v1152
        %v1154 = vpop.f32.mrf.mxu0
        %v1155 = vadd.f32 0.0, %v1154
        %1156 = vmatmul.bf16.gmra.mxu0 %v1131
        %v1157 = vpop.f32.mrf.mxu0
        %v1158 = vadd.f32 0.0, %v1157
        %v1159 = vpop.f32.mrf.mxu0
        %v1160 = vadd.f32 0.0, %v1159
        %1161 = vdwg.mxu0
        %v1162 = vadd.f32 %v1067, %v1143
        %v1163 = vadd.f32 %v1068, %v1145
        %v1164 = vadd.f32 %v1069, %v1148
        %v1165 = vadd.f32 %v1070, %v1150
        %v1166 = vadd.f32 %v1071, %v1153
        %v1167 = vadd.f32 %v1072, %v1155
        %v1168 = vadd.f32 %v1073, %v1158
        %v1169 = vadd.f32 %v1074, %v1160
        %v1170 = vld [vmem:[%s1075] sm:$0xf]
        %v1171 = vld [vmem:[%s1075 + $0x4] sm:$0x1]
        %v1172 = vld [vmem:[%s1075 + $0x8] sm:$0xf]
        %v1173 = vld [vmem:[%s1075 + $0xc] sm:$0x1]
        %v1174 = vld [vmem:[%s1075 + $0x10] sm:$0xf]
        %v1175 = vld [vmem:[%s1075 + $0x14] sm:$0x1]
        %v1176 = vld [vmem:[%s1075 + $0x18] sm:$0xf]
        %v1177 = vld [vmem:[%s1075 + $0x1c] sm:$0x1]
        %v1178 = vld [vmem:[%s1075 + $0x20] sm:$0xf]
        %v1179 = vld [vmem:[%s1075 + $0x24] sm:$0x1]
        %v1180 = vld [vmem:[%s1075 + $0x28] sm:$0xf]
        %v1181 = vld [vmem:[%s1075 + $0x2c] sm:$0x1]
        %v1182 = vld [vmem:[%s1075 + $0x30] sm:$0xf]
        %v1183 = vld [vmem:[%s1075 + $0x34] sm:$0x1]
        %v1184 = vld [vmem:[%s1075 + $0x38] sm:$0xf]
        %v1185 = vld [vmem:[%s1075 + $0x3c] sm:$0x1]
        %v1187 = vshrl.u32 %v1170, 16
        %v1189 = vrot.slane %v1187, 4
        %v1190 = vshll.u32 %v1170, 16
        %v1192 = vrot.slane %v1190, 5
        %v1193 = vor.u32 %v1189, %v1192
        %v1194 = vrot.slane %v1193, 4
        %v1196 = vshll.u32 %v1171, 16
        %v1198 = vrot.slane %v1196, 5
        %v1199 = vsel %vm246, %v1194, %v1198
        %v1201 = vshrl.u32 %v1172, 16
        %v1203 = vrot.slane %v1201, 4
        %v1204 = vshll.u32 %v1172, 16
        %v1206 = vrot.slane %v1204, 5
        %v1207 = vor.u32 %v1203, %v1206
        %v1208 = vrot.slane %v1207, 4
        %v1210 = vshll.u32 %v1173, 16
        %v1212 = vrot.slane %v1210, 5
        %v1213 = vsel %vm246, %v1208, %v1212
        %v1215 = vshrl.u32 %v1174, 16
        %v1217 = vrot.slane %v1215, 4
        %v1218 = vshll.u32 %v1174, 16
        %v1220 = vrot.slane %v1218, 5
        %v1221 = vor.u32 %v1217, %v1220
        %v1222 = vrot.slane %v1221, 4
        %v1224 = vshll.u32 %v1175, 16
        %v1226 = vrot.slane %v1224, 5
        %v1227 = vsel %vm246, %v1222, %v1226
        %v1229 = vshrl.u32 %v1176, 16
        %v1231 = vrot.slane %v1229, 4
        %v1232 = vshll.u32 %v1176, 16
        %v1234 = vrot.slane %v1232, 5
        %v1235 = vor.u32 %v1231, %v1234
        %v1236 = vrot.slane %v1235, 4
        %v1238 = vshll.u32 %v1177, 16
        %v1240 = vrot.slane %v1238, 5
        %v1241 = vsel %vm246, %v1236, %v1240
        %v1243 = vshrl.u32 %v1178, 16
        %v1245 = vrot.slane %v1243, 4
        %v1246 = vshll.u32 %v1178, 16
        %v1248 = vrot.slane %v1246, 5
        %v1249 = vor.u32 %v1245, %v1248
        %v1250 = vrot.slane %v1249, 4
        %v1252 = vshll.u32 %v1179, 16
        %v1254 = vrot.slane %v1252, 5
        %v1255 = vsel %vm246, %v1250, %v1254
        %v1257 = vshrl.u32 %v1180, 16
        %v1259 = vrot.slane %v1257, 4
        %v1260 = vshll.u32 %v1180, 16
        %v1262 = vrot.slane %v1260, 5
        %v1263 = vor.u32 %v1259, %v1262
        %v1264 = vrot.slane %v1263, 4
        %v1266 = vshll.u32 %v1181, 16
        %v1268 = vrot.slane %v1266, 5
        %v1269 = vsel %vm246, %v1264, %v1268
        %v1271 = vshrl.u32 %v1182, 16
        %v1273 = vrot.slane %v1271, 4
        %v1274 = vshll.u32 %v1182, 16
        %v1276 = vrot.slane %v1274, 5
        %v1277 = vor.u32 %v1273, %v1276
        %v1278 = vrot.slane %v1277, 4
        %v1280 = vshll.u32 %v1183, 16
        %v1282 = vrot.slane %v1280, 5
        %v1283 = vsel %vm246, %v1278, %v1282
        %v1285 = vshrl.u32 %v1184, 16
        %v1287 = vrot.slane %v1285, 4
        %v1288 = vshll.u32 %v1184, 16
        %v1290 = vrot.slane %v1288, 5
        %v1291 = vor.u32 %v1287, %v1290
        %v1292 = vrot.slane %v1291, 4
        %v1294 = vshll.u32 %v1185, 16
        %v1296 = vrot.slane %v1294, 5
        %v1297 = vsel %vm246, %v1292, %v1296
        %s1298 = scalar_lea.vmem %s1, 112
        %v1299 = vld [vmem:[%s1298] sm:$0xf]
        %v1300 = vld [vmem:[%s1298 + $0x4] sm:$0xf]
        %v1301 = vld [vmem:[%s1298 + $0x8] sm:$0xf]
        %v1302 = vld [vmem:[%s1298 + $0xc] sm:$0xf]
        %v1303 = vunpack.c.l.b16 %v1199
        %v1304 = vunpack.c.l.b16 %v1213
        %v1305 = vunpack.c.l.b16 %v1227
        %v1306 = vunpack.c.l.b16 %v1241
        %v1307 = vunpack.c.l.b16 %v1255
        %v1308 = vunpack.c.l.b16 %v1269
        %v1309 = vunpack.c.l.b16 %v1283
        %v1310 = vunpack.c.l.b16 %v1297
        %v1311 = vpack.c.b16 %v1304, %v1303
        %v1312 = vpack.c.b16 %v1306, %v1305
        %v1313 = vpack.c.b16 %v1308, %v1307
        %v1314 = vpack.c.b16 %v1310, %v1309
        %v1319 = vunpack.c.l.b16 %v1299
        %v1320 = vunpack.c.l.b16 %v1300
        %v1321 = vunpack.c.l.b16 %v1301
        %v1322 = vunpack.c.l.b16 %v1302
        %v1323 = vpack.c.b16 %v1320, %v1319
        %v1324 = vpack.c.b16 %v1322, %v1321
        %v1328 = vsel %vm388, %v1311, 0
        %v1331 = vsel %vm388, %v1312, 0
        %v1334 = vsel %vm388, %v1313, 0
        %v1337 = vsel %vm388, %v1314, 0
        %1339 = vmatpush.bf16.msra.mxu0 0
        %1340 = vmatpush.bf16.msra.mxu0 0
        %1341 = vmatpush.bf16.msra.mxu0 0
        %1342 = vmatpush.bf16.msra.mxu0 0
        %1343 = vmatpush.bf16.msra.mxu0 0
        %1344 = vmatpush.bf16.msra.mxu0 0
        %1345 = vmatpush.bf16.msra.mxu0 %v1324
        %1346 = vmatpush.bf16.msra.mxu0 %v1323
        %1347 = vmatmul.bf16.gmra.mxu0 %v1328
        %v1348 = vpop.f32.mrf.mxu0
        %v1349 = vadd.f32 0.0, %v1348
        %v1350 = vpop.f32.mrf.mxu0
        %v1351 = vadd.f32 0.0, %v1350
        %1352 = vmatmul.bf16.gmra.mxu0 %v1331
        %v1353 = vpop.f32.mrf.mxu0
        %v1354 = vadd.f32 0.0, %v1353
        %v1355 = vpop.f32.mrf.mxu0
        %v1356 = vadd.f32 0.0, %v1355
        %1357 = vmatmul.bf16.gmra.mxu0 %v1334
        %v1358 = vpop.f32.mrf.mxu0
        %v1359 = vadd.f32 0.0, %v1358
        %v1360 = vpop.f32.mrf.mxu0
        %v1361 = vadd.f32 0.0, %v1360
        %1362 = vmatmul.bf16.gmra.mxu0 %v1337
        %v1363 = vpop.f32.mrf.mxu0
        %v1364 = vadd.f32 0.0, %v1363
        %v1365 = vpop.f32.mrf.mxu0
        %v1366 = vadd.f32 0.0, %v1365
        %1367 = vdwg.mxu0
        %v1368 = vadd.f32 %v1162, %v1349
        %v1369 = vadd.f32 %v1163, %v1351
        %v1370 = vadd.f32 %v1164, %v1354
        %v1371 = vadd.f32 %v1165, %v1356
        %v1372 = vadd.f32 %v1166, %v1359
        %v1373 = vadd.f32 %v1167, %v1361
        %v1374 = vadd.f32 %v1168, %v1364
        %v1375 = vadd.f32 %v1169, %v1366
        %v1376 = vld [vmem:[%s1075] sm:$0xe]
        %v1377 = vld [vmem:[%s1075 + $0x8] sm:$0xe]
        %v1378 = vld [vmem:[%s1075 + $0x10] sm:$0xe]
        %v1379 = vld [vmem:[%s1075 + $0x18] sm:$0xe]
        %v1380 = vld [vmem:[%s1075 + $0x20] sm:$0xe]
        %v1381 = vld [vmem:[%s1075 + $0x28] sm:$0xe]
        %v1382 = vld [vmem:[%s1075 + $0x30] sm:$0xe]
        %v1383 = vld [vmem:[%s1075 + $0x38] sm:$0xe]
        %v1400 = vrot.slane %v1376, 5
        %v1401 = vrot.slane %v1400, 4
        %v1402 = vrot.slane %v1171, 5
        %v1403 = vsel %vm529, %v1401, %v1402
        %v1404 = vrot.slane %v1377, 5
        %v1405 = vrot.slane %v1404, 4
        %v1406 = vrot.slane %v1173, 5
        %v1407 = vsel %vm529, %v1405, %v1406
        %v1408 = vrot.slane %v1378, 5
        %v1409 = vrot.slane %v1408, 4
        %v1410 = vrot.slane %v1175, 5
        %v1411 = vsel %vm529, %v1409, %v1410
        %v1412 = vrot.slane %v1379, 5
        %v1413 = vrot.slane %v1412, 4
        %v1414 = vrot.slane %v1177, 5
        %v1415 = vsel %vm529, %v1413, %v1414
        %v1416 = vrot.slane %v1380, 5
        %v1417 = vrot.slane %v1416, 4
        %v1418 = vrot.slane %v1179, 5
        %v1419 = vsel %vm529, %v1417, %v1418
        %v1420 = vrot.slane %v1381, 5
        %v1421 = vrot.slane %v1420, 4
        %v1422 = vrot.slane %v1181, 5
        %v1423 = vsel %vm529, %v1421, %v1422
        %v1424 = vrot.slane %v1382, 5
        %v1425 = vrot.slane %v1424, 4
        %v1426 = vrot.slane %v1183, 5
        %v1427 = vsel %vm529, %v1425, %v1426
        %v1428 = vrot.slane %v1383, 5
        %v1429 = vrot.slane %v1428, 4
        %v1430 = vrot.slane %v1185, 5
        %v1431 = vsel %vm529, %v1429, %v1430
        %s1432 = scalar_lea.vmem %s1, 128
        %v1433 = vld [vmem:[%s1432] sm:$0xf]
        %v1434 = vld [vmem:[%s1432 + $0x4] sm:$0xf]
        %v1435 = vld [vmem:[%s1432 + $0x8] sm:$0xf]
        %v1436 = vld [vmem:[%s1432 + $0xc] sm:$0xf]
        %v1437 = vunpack.c.l.b16 %v1403
        %v1438 = vunpack.c.l.b16 %v1407
        %v1439 = vunpack.c.l.b16 %v1411
        %v1440 = vunpack.c.l.b16 %v1415
        %v1441 = vunpack.c.l.b16 %v1419
        %v1442 = vunpack.c.l.b16 %v1423
        %v1443 = vunpack.c.l.b16 %v1427
        %v1444 = vunpack.c.l.b16 %v1431
        %v1445 = vpack.c.b16 %v1438, %v1437
        %v1446 = vpack.c.b16 %v1440, %v1439
        %v1447 = vpack.c.b16 %v1442, %v1441
        %v1448 = vpack.c.b16 %v1444, %v1443
        %v1453 = vunpack.c.l.b16 %v1433
        %v1454 = vunpack.c.l.b16 %v1434
        %v1455 = vunpack.c.l.b16 %v1435
        %v1456 = vunpack.c.l.b16 %v1436
        %v1457 = vpack.c.b16 %v1454, %v1453
        %v1458 = vpack.c.b16 %v1456, %v1455
        %v1462 = vsel %vm388, %v1445, 0
        %v1465 = vsel %vm388, %v1446, 0
        %v1468 = vsel %vm388, %v1447, 0
        %v1471 = vsel %vm388, %v1448, 0
        %1473 = vmatpush.bf16.msra.mxu0 0
        %1474 = vmatpush.bf16.msra.mxu0 0
        %1475 = vmatpush.bf16.msra.mxu0 0
        %1476 = vmatpush.bf16.msra.mxu0 0
        %1477 = vmatpush.bf16.msra.mxu0 0
        %1478 = vmatpush.bf16.msra.mxu0 0
        %1479 = vmatpush.bf16.msra.mxu0 %v1458
        %1480 = vmatpush.bf16.msra.mxu0 %v1457
        %1481 = vmatmul.bf16.gmra.mxu0 %v1462
        %v1482 = vpop.f32.mrf.mxu0
        %v1483 = vadd.f32 0.0, %v1482
        %v1484 = vpop.f32.mrf.mxu0
        %v1485 = vadd.f32 0.0, %v1484
        %1486 = vmatmul.bf16.gmra.mxu0 %v1465
        %v1487 = vpop.f32.mrf.mxu0
        %v1488 = vadd.f32 0.0, %v1487
        %v1489 = vpop.f32.mrf.mxu0
        %v1490 = vadd.f32 0.0, %v1489
        %1491 = vmatmul.bf16.gmra.mxu0 %v1468
        %v1492 = vpop.f32.mrf.mxu0
        %v1493 = vadd.f32 0.0, %v1492
        %v1494 = vpop.f32.mrf.mxu0
        %v1495 = vadd.f32 0.0, %v1494
        %1496 = vmatmul.bf16.gmra.mxu0 %v1471
        %v1497 = vpop.f32.mrf.mxu0
        %v1498 = vadd.f32 0.0, %v1497
        %v1499 = vpop.f32.mrf.mxu0
        %v1500 = vadd.f32 0.0, %v1499
        %1501 = vdwg.mxu0
        %v1502 = vadd.f32 %v1368, %v1483
        %v1503 = vadd.f32 %v1369, %v1485
        %v1504 = vadd.f32 %v1370, %v1488
        %v1505 = vadd.f32 %v1371, %v1490
        %v1506 = vadd.f32 %v1372, %v1493
        %v1507 = vadd.f32 %v1373, %v1495
        %v1508 = vadd.f32 %v1374, %v1498
        %v1509 = vadd.f32 %v1375, %v1500
        %v1510 = vld [vmem:[%s2] sm:$0x1]
        %v1512 = vperm.slane %v1510, 0
        %v1514 = vadd.f32 %v1502, %v1512
        %v1515 = vadd.f32 %v1503, %v1512
        %v1516 = vadd.f32 %v1504, %v1512
        %v1517 = vadd.f32 %v1505, %v1512
        %v1518 = vadd.f32 %v1506, %v1512
        %v1519 = vadd.f32 %v1507, %v1512
        %v1520 = vadd.f32 %v1508, %v1512
        %v1521 = vadd.f32 %v1509, %v1512
        %v1522 = vmax.f32 %v1514, 0.0
        %v1523 = vmax.f32 %v1515, 0.0
        %v1524 = vmax.f32 %v1516, 0.0
        %v1525 = vmax.f32 %v1517, 0.0
        %v1526 = vmax.f32 %v1518, 0.0
        %v1527 = vmax.f32 %v1519, 0.0
        %v1528 = vmax.f32 %v1520, 0.0
        %v1529 = vmax.f32 %v1521, 0.0
        %vm1530 = vcmask 519168
        %1531 = vst.msk [vmem:[#allocation2] sm:$0xf] %vm1530, 0
        %vm1532 = vcmask 516096
        %1533 = vst.msk [vmem:[#allocation2 + $0x4] sm:$0x1] %vm1532, 0
        %1534 = vst.msk [vmem:[#allocation2 + $0x8] sm:$0xf] %vm1530, 0
        %1535 = vst.msk [vmem:[#allocation2 + $0xc] sm:$0x1] %vm1532, 0
        %1536 = vst.msk [vmem:[#allocation2 + $0x10] sm:$0xf] %vm1530, 0
        %1537 = vst.msk [vmem:[#allocation2 + $0x14] sm:$0x1] %vm1532, 0
        %1538 = vst.msk [vmem:[#allocation2 + $0x18] sm:$0xf] %vm1530, 0
        %1539 = vst.msk [vmem:[#allocation2 + $0x1c] sm:$0x1] %vm1532, 0
        %1540 = vst.msk [vmem:[#allocation2 + $0x20] sm:$0xf] %vm1530, 0
        %1541 = vst.msk [vmem:[#allocation2 + $0x24] sm:$0x1] %vm1532, 0
        %1542 = vst.msk [vmem:[#allocation2 + $0x28] sm:$0xf] %vm1530, 0
        %1543 = vst.msk [vmem:[#allocation2 + $0x2c] sm:$0x1] %vm1532, 0
        %1544 = vst.msk [vmem:[#allocation2 + $0x30] sm:$0xf] %vm1530, 0
        %1545 = vst.msk [vmem:[#allocation2 + $0x34] sm:$0x1] %vm1532, 0
        %1546 = vst.msk [vmem:[#allocation2 + $0x38] sm:$0xf] %vm1530, 0
        %1547 = vst.msk [vmem:[#allocation2 + $0x3c] sm:$0x1] %vm1532, 0
        %1548 = vst.msk [vmem:[#allocation2 + $0x40] sm:$0xf] %vm1530, 0
        %1549 = vst.msk [vmem:[#allocation2 + $0x44] sm:$0x1] %vm1532, 0
        %1550 = vst.msk [vmem:[#allocation2 + $0x48] sm:$0xf] %vm1530, 0
        %1551 = vst.msk [vmem:[#allocation2 + $0x4c] sm:$0x1] %vm1532, 0
        %v1552 = vpack.c.bf16 %v1522, %v1522
        %v1553 = vpack.c.bf16 %v1523, %v1523
        %v1554 = vpack.c.bf16 %v1524, %v1524
        %v1555 = vpack.c.bf16 %v1525, %v1525
        %v1556 = vpack.c.bf16 %v1526, %v1526
        %v1557 = vpack.c.bf16 %v1527, %v1527
        %v1558 = vpack.c.bf16 %v1528, %v1528
        %v1559 = vpack.c.bf16 %v1529, %v1529
        %v1561 = vshrl.u32 %v1552, 16
        %v1563 = vrot.slane %v1561, 7
        %v1564 = vshll.u32 %v1552, 16
        %v1566 = vor.u32 %v1563, %v1564
        %v1567 = vrot.slane %v1563, 4
        %v1569 = vshrl.u32 %v1553, 16
        %v1571 = vrot.slane %v1569, 7
        %v1572 = vshll.u32 %v1553, 16
        %v1574 = vor.u32 %v1571, %v1572
        %v1575 = vrot.slane %v1571, 4
        %v1577 = vshrl.u32 %v1554, 16
        %v1579 = vrot.slane %v1577, 7
        %v1580 = vshll.u32 %v1554, 16
        %v1582 = vor.u32 %v1579, %v1580
        %v1583 = vrot.slane %v1579, 4
        %v1585 = vshrl.u32 %v1555, 16
        %v1587 = vrot.slane %v1585, 7
        %v1588 = vshll.u32 %v1555, 16
        %v1590 = vor.u32 %v1587, %v1588
        %v1591 = vrot.slane %v1587, 4
        %v1593 = vshrl.u32 %v1556, 16
        %v1595 = vrot.slane %v1593, 7
        %v1596 = vshll.u32 %v1556, 16
        %v1598 = vor.u32 %v1595, %v1596
        %v1599 = vrot.slane %v1595, 4
        %v1601 = vshrl.u32 %v1557, 16
        %v1603 = vrot.slane %v1601, 7
        %v1604 = vshll.u32 %v1557, 16
        %v1606 = vor.u32 %v1603, %v1604
        %v1607 = vrot.slane %v1603, 4
        %v1609 = vshrl.u32 %v1558, 16
        %v1611 = vrot.slane %v1609, 7
        %v1612 = vshll.u32 %v1558, 16
        %v1614 = vor.u32 %v1611, %v1612
        %v1615 = vrot.slane %v1611, 4
        %v1617 = vshrl.u32 %v1559, 16
        %v1619 = vrot.slane %v1617, 7
        %v1620 = vshll.u32 %v1559, 16
        %v1622 = vor.u32 %v1619, %v1620
        %v1623 = vrot.slane %v1619, 4
        %s1640 = scalar_lea.vmem [#allocation2], 8
        %vm1641 = vcmask 519168
        %vm1642 = vsmask.f32 7938
        %vm1643 = vmand %vm1641, %vm1642
        %v1644 = vld [vmem:[%s1640] sm:$0xf]
        %v1645 = vsel %vm1643, %v1566, %v1644
        %1646 = vst [vmem:[%s1640] sm:$0xf] %v1645
        %vm1647 = vcmask 516096
        %vm1648 = vsmask.f32 256
        %vm1649 = vmand %vm1647, %vm1648
        %v1650 = vld [vmem:[%s1640 + $0x4] sm:$0x1]
        %v1651 = vsel %vm1649, %v1567, %v1650
        %1652 = vst [vmem:[%s1640 + $0x4] sm:$0x1] %v1651
        %v1653 = vld [vmem:[%s1640 + $0x8] sm:$0xf]
        %v1654 = vsel %vm1643, %v1574, %v1653
        %1655 = vst [vmem:[%s1640 + $0x8] sm:$0xf] %v1654
        %v1656 = vld [vmem:[%s1640 + $0xc] sm:$0x1]
        %v1657 = vsel %vm1649, %v1575, %v1656
        %1658 = vst [vmem:[%s1640 + $0xc] sm:$0x1] %v1657
        %v1659 = vld [vmem:[%s1640 + $0x10] sm:$0xf]
        %v1660 = vsel %vm1643, %v1582, %v1659
        %1661 = vst [vmem:[%s1640 + $0x10] sm:$0xf] %v1660
        %v1662 = vld [vmem:[%s1640 + $0x14] sm:$0x1]
        %v1663 = vsel %vm1649, %v1583, %v1662
        %1664 = vst [vmem:[%s1640 + $0x14] sm:$0x1] %v1663
        %v1665 = vld [vmem:[%s1640 + $0x18] sm:$0xf]
        %v1666 = vsel %vm1643, %v1590, %v1665
        %1667 = vst [vmem:[%s1640 + $0x18] sm:$0xf] %v1666
        %v1668 = vld [vmem:[%s1640 + $0x1c] sm:$0x1]
        %v1669 = vsel %vm1649, %v1591, %v1668
        %1670 = vst [vmem:[%s1640 + $0x1c] sm:$0x1] %v1669
        %v1671 = vld [vmem:[%s1640 + $0x20] sm:$0xf]
        %v1672 = vsel %vm1643, %v1598, %v1671
        %1673 = vst [vmem:[%s1640 + $0x20] sm:$0xf] %v1672
        %v1674 = vld [vmem:[%s1640 + $0x24] sm:$0x1]
        %v1675 = vsel %vm1649, %v1599, %v1674
        %1676 = vst [vmem:[%s1640 + $0x24] sm:$0x1] %v1675
        %v1677 = vld [vmem:[%s1640 + $0x28] sm:$0xf]
        %v1678 = vsel %vm1643, %v1606, %v1677
        %1679 = vst [vmem:[%s1640 + $0x28] sm:$0xf] %v1678
        %v1680 = vld [vmem:[%s1640 + $0x2c] sm:$0x1]
        %v1681 = vsel %vm1649, %v1607, %v1680
        %1682 = vst [vmem:[%s1640 + $0x2c] sm:$0x1] %v1681
        %v1683 = vld [vmem:[%s1640 + $0x30] sm:$0xf]
        %v1684 = vsel %vm1643, %v1614, %v1683
        %1685 = vst [vmem:[%s1640 + $0x30] sm:$0xf] %v1684
        %v1686 = vld [vmem:[%s1640 + $0x34] sm:$0x1]
        %v1687 = vsel %vm1649, %v1615, %v1686
        %1688 = vst [vmem:[%s1640 + $0x34] sm:$0x1] %v1687
        %v1689 = vld [vmem:[%s1640 + $0x38] sm:$0xf]
        %v1690 = vsel %vm1643, %v1622, %v1689
        %1691 = vst [vmem:[%s1640 + $0x38] sm:$0xf] %v1690
        %v1692 = vld [vmem:[%s1640 + $0x3c] sm:$0x1]
        %v1693 = vsel %vm1649, %v1623, %v1692
        %1694 = vst [vmem:[%s1640 + $0x3c] sm:$0x1] %v1693
        %v1695 = vld [vmem:[#allocation2] sm:$0xf]
        %v1696 = vld [vmem:[#allocation2 + $0x8] sm:$0xf]
        %v1697 = vld [vmem:[#allocation2 + $0x10] sm:$0xf]
        %v1698 = vld [vmem:[#allocation2 + $0x18] sm:$0xf]
        %v1699 = vld [vmem:[#allocation2 + $0x20] sm:$0xf]
        %v1700 = vld [vmem:[#allocation2 + $0x28] sm:$0xf]
        %v1701 = vld [vmem:[#allocation2 + $0x30] sm:$0xf]
        %v1702 = vld [vmem:[#allocation2 + $0x38] sm:$0xf]
        %v1703 = vld [vmem:[%s3] sm:$0xf]
        %v1704 = vld [vmem:[%s3 + $0x4] sm:$0xf]
        %v1705 = vld [vmem:[%s3 + $0x8] sm:$0xf]
        %v1706 = vld [vmem:[%s3 + $0xc] sm:$0xf]
        %v1707 = vld [vmem:[%s3 + $0x10] sm:$0xf]
        %v1708 = vld [vmem:[%s3 + $0x14] sm:$0xf]
        %v1709 = vld [vmem:[%s3 + $0x18] sm:$0xf]
        %v1710 = vld [vmem:[%s3 + $0x1c] sm:$0xf]
        %v1711 = vld [vmem:[#allocation2 + $0x4] sm:$0x1]
        %v1712 = vld [vmem:[#allocation2 + $0xc] sm:$0x1]
        %v1713 = vld [vmem:[#allocation2 + $0x14] sm:$0x1]
        %v1714 = vld [vmem:[#allocation2 + $0x1c] sm:$0x1]
        %v1715 = vld [vmem:[#allocation2 + $0x24] sm:$0x1]
        %v1716 = vld [vmem:[#allocation2 + $0x2c] sm:$0x1]
        %v1717 = vld [vmem:[#allocation2 + $0x34] sm:$0x1]
        %v1718 = vld [vmem:[#allocation2 + $0x3c] sm:$0x1]
        %v1720 = vshrl.u32 %v1695, 16
        %v1722 = vrot.slane %v1720, 4
        %v1723 = vshll.u32 %v1695, 16
        %v1725 = vrot.slane %v1723, 5
        %v1726 = vor.u32 %v1722, %v1725
        %v1727 = vrot.slane %v1726, 4
        %v1729 = vshll.u32 %v1711, 16
        %v1731 = vrot.slane %v1729, 5
        %v1732 = vsel %vm246, %v1727, %v1731
        %v1734 = vshrl.u32 %v1696, 16
        %v1736 = vrot.slane %v1734, 4
        %v1737 = vshll.u32 %v1696, 16
        %v1739 = vrot.slane %v1737, 5
        %v1740 = vor.u32 %v1736, %v1739
        %v1741 = vrot.slane %v1740, 4
        %v1743 = vshll.u32 %v1712, 16
        %v1745 = vrot.slane %v1743, 5
        %v1746 = vsel %vm246, %v1741, %v1745
        %v1748 = vshrl.u32 %v1697, 16
        %v1750 = vrot.slane %v1748, 4
        %v1751 = vshll.u32 %v1697, 16
        %v1753 = vrot.slane %v1751, 5
        %v1754 = vor.u32 %v1750, %v1753
        %v1755 = vrot.slane %v1754, 4
        %v1757 = vshll.u32 %v1713, 16
        %v1759 = vrot.slane %v1757, 5
        %v1760 = vsel %vm246, %v1755, %v1759
        %v1762 = vshrl.u32 %v1698, 16
        %v1764 = vrot.slane %v1762, 4
        %v1765 = vshll.u32 %v1698, 16
        %v1767 = vrot.slane %v1765, 5
        %v1768 = vor.u32 %v1764, %v1767
        %v1769 = vrot.slane %v1768, 4
        %v1771 = vshll.u32 %v1714, 16
        %v1773 = vrot.slane %v1771, 5
        %v1774 = vsel %vm246, %v1769, %v1773
        %v1776 = vshrl.u32 %v1699, 16
        %v1778 = vrot.slane %v1776, 4
        %v1779 = vshll.u32 %v1699, 16
        %v1781 = vrot.slane %v1779, 5
        %v1782 = vor.u32 %v1778, %v1781
        %v1783 = vrot.slane %v1782, 4
        %v1785 = vshll.u32 %v1715, 16
        %v1787 = vrot.slane %v1785, 5
        %v1788 = vsel %vm246, %v1783, %v1787
        %v1790 = vshrl.u32 %v1700, 16
        %v1792 = vrot.slane %v1790, 4
        %v1793 = vshll.u32 %v1700, 16
        %v1795 = vrot.slane %v1793, 5
        %v1796 = vor.u32 %v1792, %v1795
        %v1797 = vrot.slane %v1796, 4
        %v1799 = vshll.u32 %v1716, 16
        %v1801 = vrot.slane %v1799, 5
        %v1802 = vsel %vm246, %v1797, %v1801
        %v1804 = vshrl.u32 %v1701, 16
        %v1806 = vrot.slane %v1804, 4
        %v1807 = vshll.u32 %v1701, 16
        %v1809 = vrot.slane %v1807, 5
        %v1810 = vor.u32 %v1806, %v1809
        %v1811 = vrot.slane %v1810, 4
        %v1813 = vshll.u32 %v1717, 16
        %v1815 = vrot.slane %v1813, 5
        %v1816 = vsel %vm246, %v1811, %v1815
        %v1818 = vshrl.u32 %v1702, 16
        %v1820 = vrot.slane %v1818, 4
        %v1821 = vshll.u32 %v1702, 16
        %v1823 = vrot.slane %v1821, 5
        %v1824 = vor.u32 %v1820, %v1823
        %v1825 = vrot.slane %v1824, 4
        %v1827 = vshll.u32 %v1718, 16
        %v1829 = vrot.slane %v1827, 5
        %v1830 = vsel %vm246, %v1825, %v1829
        %s1831 = scalar_lea.vmem %s3, 32
        %v1832 = vld [vmem:[%s1831] sm:$0xf]
        %v1833 = vld [vmem:[%s1831 + $0x4] sm:$0xf]
        %v1834 = vld [vmem:[%s1831 + $0x8] sm:$0xf]
        %v1835 = vld [vmem:[%s1831 + $0xc] sm:$0xf]
        %v1836 = vld [vmem:[%s1831 + $0x10] sm:$0xf]
        %v1837 = vld [vmem:[%s1831 + $0x14] sm:$0xf]
        %v1838 = vld [vmem:[%s1831 + $0x18] sm:$0xf]
        %v1839 = vld [vmem:[%s1831 + $0x1c] sm:$0xf]
        %v1840 = vunpack.c.l.b16 %v1732
        %v1841 = vunpack.c.l.b16 %v1746
        %v1842 = vunpack.c.l.b16 %v1760
        %v1843 = vunpack.c.l.b16 %v1774
        %v1844 = vunpack.c.l.b16 %v1788
        %v1845 = vunpack.c.l.b16 %v1802
        %v1846 = vunpack.c.l.b16 %v1816
        %v1847 = vunpack.c.l.b16 %v1830
        %v1848 = vpack.c.b16 %v1841, %v1840
        %v1849 = vpack.c.b16 %v1843, %v1842
        %v1850 = vpack.c.b16 %v1845, %v1844
        %v1851 = vpack.c.b16 %v1847, %v1846
        %v1860 = vunpack.c.l.b16 %v1832
        %v1861 = vunpack.c.l.b16 %v1833
        %v1862 = vunpack.c.l.b16 %v1834
        %v1863 = vunpack.c.l.b16 %v1835
        %v1864 = vunpack.c.l.b16 %v1836
        %v1865 = vunpack.c.l.b16 %v1837
        %v1866 = vunpack.c.l.b16 %v1838
        %v1867 = vunpack.c.l.b16 %v1839
        %v1868 = vpack.c.b16 %v1861, %v1860
        %v1869 = vpack.c.b16 %v1863, %v1862
        %v1870 = vpack.c.b16 %v1865, %v1864
        %v1871 = vpack.c.b16 %v1867, %v1866
        %vm1876 = vcmask 523264
        %v1878 = vsel %vm1876, %v1848, 0
        %v1881 = vsel %vm1876, %v1849, 0
        %v1884 = vsel %vm1876, %v1850, 0
        %v1887 = vsel %vm1876, %v1851, 0
        %1889 = vmatpush.bf16.msra.mxu0 0
        %1890 = vmatpush.bf16.msra.mxu0 0
        %1891 = vmatpush.bf16.msra.mxu0 0
        %1892 = vmatpush.bf16.msra.mxu0 0
        %1893 = vmatpush.bf16.msra.mxu0 %v1871
        %1894 = vmatpush.bf16.msra.mxu0 %v1870
        %1895 = vmatpush.bf16.msra.mxu0 %v1869
        %1896 = vmatpush.bf16.msra.mxu0 %v1868
        %1897 = vmatmul.bf16.gmra.mxu0 %v1878
        %v1898 = vpop.f32.mrf.mxu0
        %v1899 = vadd.f32 0.0, %v1898
        %v1900 = vpop.f32.mrf.mxu0
        %v1901 = vadd.f32 0.0, %v1900
        %1902 = vmatmul.bf16.gmra.mxu0 %v1881
        %v1903 = vpop.f32.mrf.mxu0
        %v1904 = vadd.f32 0.0, %v1903
        %v1905 = vpop.f32.mrf.mxu0
        %v1906 = vadd.f32 0.0, %v1905
        %1907 = vmatmul.bf16.gmra.mxu0 %v1884
        %v1908 = vpop.f32.mrf.mxu0
        %v1909 = vadd.f32 0.0, %v1908
        %v1910 = vpop.f32.mrf.mxu0
        %v1911 = vadd.f32 0.0, %v1910
        %1912 = vmatmul.bf16.gmra.mxu0 %v1887
        %v1913 = vpop.f32.mrf.mxu0
        %v1914 = vadd.f32 0.0, %v1913
        %v1915 = vpop.f32.mrf.mxu0
        %v1916 = vadd.f32 0.0, %v1915
        %1917 = vdwg.mxu0
        %v1926 = vunpack.c.l.b16 %v1695
        %v1927 = vunpack.c.l.b16 %v1696
        %v1928 = vunpack.c.l.b16 %v1697
        %v1929 = vunpack.c.l.b16 %v1698
        %v1930 = vunpack.c.l.b16 %v1699
        %v1931 = vunpack.c.l.b16 %v1700
        %v1932 = vunpack.c.l.b16 %v1701
        %v1933 = vunpack.c.l.b16 %v1702
        %v1934 = vpack.c.b16 %v1927, %v1926
        %v1935 = vpack.c.b16 %v1929, %v1928
        %v1936 = vpack.c.b16 %v1931, %v1930
        %v1937 = vpack.c.b16 %v1933, %v1932
        %v1946 = vunpack.c.l.b16 %v1703
        %v1947 = vunpack.c.l.b16 %v1704
        %v1948 = vunpack.c.l.b16 %v1705
        %v1949 = vunpack.c.l.b16 %v1706
        %v1950 = vunpack.c.l.b16 %v1707
        %v1951 = vunpack.c.l.b16 %v1708
        %v1952 = vunpack.c.l.b16 %v1709
        %v1953 = vunpack.c.l.b16 %v1710
        %v1954 = vpack.c.b16 %v1947, %v1946
        %v1955 = vpack.c.b16 %v1949, %v1948
        %v1956 = vpack.c.b16 %v1951, %v1950
        %v1957 = vpack.c.b16 %v1953, %v1952
        %v1963 = vsel %vm1876, %v1934, 0
        %v1966 = vsel %vm1876, %v1935, 0
        %v1969 = vsel %vm1876, %v1936, 0
        %v1972 = vsel %vm1876, %v1937, 0
        %1974 = vmatpush.bf16.msra.mxu0 0
        %1975 = vmatpush.bf16.msra.mxu0 0
        %1976 = vmatpush.bf16.msra.mxu0 0
        %1977 = vmatpush.bf16.msra.mxu0 0
        %1978 = vmatpush.bf16.msra.mxu0 %v1957
        %1979 = vmatpush.bf16.msra.mxu0 %v1956
        %1980 = vmatpush.bf16.msra.mxu0 %v1955
        %1981 = vmatpush.bf16.msra.mxu0 %v1954
        %1982 = vmatmul.bf16.gmra.mxu0 %v1963
        %v1983 = vpop.f32.mrf.mxu0
        %v1984 = vadd.f32 %v1899, %v1983
        %v1985 = vpop.f32.mrf.mxu0
        %v1986 = vadd.f32 %v1901, %v1985
        %1987 = vmatmul.bf16.gmra.mxu0 %v1966
        %v1988 = vpop.f32.mrf.mxu0
        %v1989 = vadd.f32 %v1904, %v1988
        %v1990 = vpop.f32.mrf.mxu0
        %v1991 = vadd.f32 %v1906, %v1990
        %1992 = vmatmul.bf16.gmra.mxu0 %v1969
        %v1993 = vpop.f32.mrf.mxu0
        %v1994 = vadd.f32 %v1909, %v1993
        %v1995 = vpop.f32.mrf.mxu0
        %v1996 = vadd.f32 %v1911, %v1995
        %1997 = vmatmul.bf16.gmra.mxu0 %v1972
        %v1998 = vpop.f32.mrf.mxu0
        %v1999 = vadd.f32 %v1914, %v1998
        %v2000 = vpop.f32.mrf.mxu0
        %v2001 = vadd.f32 %v1916, %v2000
        %2002 = vdwg.mxu0
        %v2003 = vld [vmem:[#allocation2] sm:$0xe]
        %v2004 = vld [vmem:[#allocation2 + $0x8] sm:$0xe]
        %v2005 = vld [vmem:[#allocation2 + $0x10] sm:$0xe]
        %v2006 = vld [vmem:[#allocation2 + $0x18] sm:$0xe]
        %v2007 = vld [vmem:[#allocation2 + $0x20] sm:$0xe]
        %v2008 = vld [vmem:[#allocation2 + $0x28] sm:$0xe]
        %v2009 = vld [vmem:[#allocation2 + $0x30] sm:$0xe]
        %v2010 = vld [vmem:[#allocation2 + $0x38] sm:$0xe]
        %v2027 = vrot.slane %v2003, 5
        %v2028 = vrot.slane %v2027, 4
        %v2029 = vrot.slane %v1711, 5
        %v2030 = vsel %vm529, %v2028, %v2029
        %v2031 = vrot.slane %v2004, 5
        %v2032 = vrot.slane %v2031, 4
        %v2033 = vrot.slane %v1712, 5
        %v2034 = vsel %vm529, %v2032, %v2033
        %v2035 = vrot.slane %v2005, 5
        %v2036 = vrot.slane %v2035, 4
        %v2037 = vrot.slane %v1713, 5
        %v2038 = vsel %vm529, %v2036, %v2037
        %v2039 = vrot.slane %v2006, 5
        %v2040 = vrot.slane %v2039, 4
        %v2041 = vrot.slane %v1714, 5
        %v2042 = vsel %vm529, %v2040, %v2041
        %v2043 = vrot.slane %v2007, 5
        %v2044 = vrot.slane %v2043, 4
        %v2045 = vrot.slane %v1715, 5
        %v2046 = vsel %vm529, %v2044, %v2045
        %v2047 = vrot.slane %v2008, 5
        %v2048 = vrot.slane %v2047, 4
        %v2049 = vrot.slane %v1716, 5
        %v2050 = vsel %vm529, %v2048, %v2049
        %v2051 = vrot.slane %v2009, 5
        %v2052 = vrot.slane %v2051, 4
        %v2053 = vrot.slane %v1717, 5
        %v2054 = vsel %vm529, %v2052, %v2053
        %v2055 = vrot.slane %v2010, 5
        %v2056 = vrot.slane %v2055, 4
        %v2057 = vrot.slane %v1718, 5
        %v2058 = vsel %vm529, %v2056, %v2057
        %s2059 = scalar_lea.vmem %s3, 64
        %v2060 = vld [vmem:[%s2059] sm:$0xf]
        %v2061 = vld [vmem:[%s2059 + $0x4] sm:$0xf]
        %v2062 = vld [vmem:[%s2059 + $0x8] sm:$0xf]
        %v2063 = vld [vmem:[%s2059 + $0xc] sm:$0xf]
        %v2064 = vld [vmem:[%s2059 + $0x10] sm:$0xf]
        %v2065 = vld [vmem:[%s2059 + $0x14] sm:$0xf]
        %v2066 = vld [vmem:[%s2059 + $0x18] sm:$0xf]
        %v2067 = vld [vmem:[%s2059 + $0x1c] sm:$0xf]
        %v2068 = vunpack.c.l.b16 %v2030
        %v2069 = vunpack.c.l.b16 %v2034
        %v2070 = vunpack.c.l.b16 %v2038
        %v2071 = vunpack.c.l.b16 %v2042
        %v2072 = vunpack.c.l.b16 %v2046
        %v2073 = vunpack.c.l.b16 %v2050
        %v2074 = vunpack.c.l.b16 %v2054
        %v2075 = vunpack.c.l.b16 %v2058
        %v2076 = vpack.c.b16 %v2069, %v2068
        %v2077 = vpack.c.b16 %v2071, %v2070
        %v2078 = vpack.c.b16 %v2073, %v2072
        %v2079 = vpack.c.b16 %v2075, %v2074
        %v2088 = vunpack.c.l.b16 %v2060
        %v2089 = vunpack.c.l.b16 %v2061
        %v2090 = vunpack.c.l.b16 %v2062
        %v2091 = vunpack.c.l.b16 %v2063
        %v2092 = vunpack.c.l.b16 %v2064
        %v2093 = vunpack.c.l.b16 %v2065
        %v2094 = vunpack.c.l.b16 %v2066
        %v2095 = vunpack.c.l.b16 %v2067
        %v2096 = vpack.c.b16 %v2089, %v2088
        %v2097 = vpack.c.b16 %v2091, %v2090
        %v2098 = vpack.c.b16 %v2093, %v2092
        %v2099 = vpack.c.b16 %v2095, %v2094
        %v2105 = vsel %vm1876, %v2076, 0
        %v2108 = vsel %vm1876, %v2077, 0
        %v2111 = vsel %vm1876, %v2078, 0
        %v2114 = vsel %vm1876, %v2079, 0
        %2116 = vmatpush.bf16.msra.mxu0 0
        %2117 = vmatpush.bf16.msra.mxu0 0
        %2118 = vmatpush.bf16.msra.mxu0 0
        %2119 = vmatpush.bf16.msra.mxu0 0
        %2120 = vmatpush.bf16.msra.mxu0 %v2099
        %2121 = vmatpush.bf16.msra.mxu0 %v2098
        %2122 = vmatpush.bf16.msra.mxu0 %v2097
        %2123 = vmatpush.bf16.msra.mxu0 %v2096
        %2124 = vmatmul.bf16.gmra.mxu0 %v2105
        %v2125 = vpop.f32.mrf.mxu0
        %v2126 = vadd.f32 0.0, %v2125
        %v2127 = vpop.f32.mrf.mxu0
        %v2128 = vadd.f32 0.0, %v2127
        %2129 = vmatmul.bf16.gmra.mxu0 %v2108
        %v2130 = vpop.f32.mrf.mxu0
        %v2131 = vadd.f32 0.0, %v2130
        %v2132 = vpop.f32.mrf.mxu0
        %v2133 = vadd.f32 0.0, %v2132
        %2134 = vmatmul.bf16.gmra.mxu0 %v2111
        %v2135 = vpop.f32.mrf.mxu0
        %v2136 = vadd.f32 0.0, %v2135
        %v2137 = vpop.f32.mrf.mxu0
        %v2138 = vadd.f32 0.0, %v2137
        %2139 = vmatmul.bf16.gmra.mxu0 %v2114
        %v2140 = vpop.f32.mrf.mxu0
        %v2141 = vadd.f32 0.0, %v2140
        %v2142 = vpop.f32.mrf.mxu0
        %v2143 = vadd.f32 0.0, %v2142
        %2144 = vdwg.mxu0
        %v2145 = vadd.f32 %v1984, %v2126
        %v2146 = vadd.f32 %v1986, %v2128
        %v2147 = vadd.f32 %v1989, %v2131
        %v2148 = vadd.f32 %v1991, %v2133
        %v2149 = vadd.f32 %v1994, %v2136
        %v2150 = vadd.f32 %v1996, %v2138
        %v2151 = vadd.f32 %v1999, %v2141
        %v2152 = vadd.f32 %v2001, %v2143
        %v2153 = vld [vmem:[%s1640] sm:$0xf]
        %v2154 = vld [vmem:[%s1640 + $0x8] sm:$0xf]
        %v2155 = vld [vmem:[%s1640 + $0x10] sm:$0xf]
        %v2156 = vld [vmem:[%s1640 + $0x18] sm:$0xf]
        %v2157 = vld [vmem:[%s1640 + $0x20] sm:$0xf]
        %v2158 = vld [vmem:[%s1640 + $0x28] sm:$0xf]
        %v2159 = vld [vmem:[%s1640 + $0x30] sm:$0xf]
        %v2160 = vld [vmem:[%s1640 + $0x38] sm:$0xf]
        %s2161 = scalar_lea.vmem %s3, 96
        %v2162 = vld [vmem:[%s2161] sm:$0xf]
        %v2163 = vld [vmem:[%s2161 + $0x4] sm:$0xf]
        %v2164 = vld [vmem:[%s2161 + $0x8] sm:$0xf]
        %v2165 = vld [vmem:[%s2161 + $0xc] sm:$0xf]
        %v2166 = vld [vmem:[%s2161 + $0x10] sm:$0xf]
        %v2167 = vld [vmem:[%s2161 + $0x14] sm:$0xf]
        %v2168 = vld [vmem:[%s2161 + $0x18] sm:$0xf]
        %v2169 = vld [vmem:[%s2161 + $0x1c] sm:$0xf]
        %v2178 = vunpack.c.l.b16 %v2153
        %v2179 = vunpack.c.l.b16 %v2154
        %v2180 = vunpack.c.l.b16 %v2155
        %v2181 = vunpack.c.l.b16 %v2156
        %v2182 = vunpack.c.l.b16 %v2157
        %v2183 = vunpack.c.l.b16 %v2158
        %v2184 = vunpack.c.l.b16 %v2159
        %v2185 = vunpack.c.l.b16 %v2160
        %v2186 = vpack.c.b16 %v2179, %v2178
        %v2187 = vpack.c.b16 %v2181, %v2180
        %v2188 = vpack.c.b16 %v2183, %v2182
        %v2189 = vpack.c.b16 %v2185, %v2184
        %v2198 = vunpack.c.l.b16 %v2162
        %v2199 = vunpack.c.l.b16 %v2163
        %v2200 = vunpack.c.l.b16 %v2164
        %v2201 = vunpack.c.l.b16 %v2165
        %v2202 = vunpack.c.l.b16 %v2166
        %v2203 = vunpack.c.l.b16 %v2167
        %v2204 = vunpack.c.l.b16 %v2168
        %v2205 = vunpack.c.l.b16 %v2169
        %v2206 = vpack.c.b16 %v2199, %v2198
        %v2207 = vpack.c.b16 %v2201, %v2200
        %v2208 = vpack.c.b16 %v2203, %v2202
        %v2209 = vpack.c.b16 %v2205, %v2204
        %v2215 = vsel %vm1876, %v2186, 0
        %v2218 = vsel %vm1876, %v2187, 0
        %v2221 = vsel %vm1876, %v2188, 0
        %v2224 = vsel %vm1876, %v2189, 0
        %2226 = vmatpush.bf16.msra.mxu0 0
        %2227 = vmatpush.bf16.msra.mxu0 0
        %2228 = vmatpush.bf16.msra.mxu0 0
        %2229 = vmatpush.bf16.msra.mxu0 0
        %2230 = vmatpush.bf16.msra.mxu0 %v2209
        %2231 = vmatpush.bf16.msra.mxu0 %v2208
        %2232 = vmatpush.bf16.msra.mxu0 %v2207
        %2233 = vmatpush.bf16.msra.mxu0 %v2206
        %2234 = vmatmul.bf16.gmra.mxu0 %v2215
        %v2235 = vpop.f32.mrf.mxu0
        %v2236 = vadd.f32 0.0, %v2235
        %v2237 = vpop.f32.mrf.mxu0
        %v2238 = vadd.f32 0.0, %v2237
        %2239 = vmatmul.bf16.gmra.mxu0 %v2218
        %v2240 = vpop.f32.mrf.mxu0
        %v2241 = vadd.f32 0.0, %v2240
        %v2242 = vpop.f32.mrf.mxu0
        %v2243 = vadd.f32 0.0, %v2242
        %2244 = vmatmul.bf16.gmra.mxu0 %v2221
        %v2245 = vpop.f32.mrf.mxu0
        %v2246 = vadd.f32 0.0, %v2245
        %v2247 = vpop.f32.mrf.mxu0
        %v2248 = vadd.f32 0.0, %v2247
        %2249 = vmatmul.bf16.gmra.mxu0 %v2224
        %v2250 = vpop.f32.mrf.mxu0
        %v2251 = vadd.f32 0.0, %v2250
        %v2252 = vpop.f32.mrf.mxu0
        %v2253 = vadd.f32 0.0, %v2252
        %2254 = vdwg.mxu0
        %v2255 = vadd.f32 %v2145, %v2236
        %v2256 = vadd.f32 %v2146, %v2238
        %v2257 = vadd.f32 %v2147, %v2241
        %v2258 = vadd.f32 %v2148, %v2243
        %v2259 = vadd.f32 %v2149, %v2246
        %v2260 = vadd.f32 %v2150, %v2248
        %v2261 = vadd.f32 %v2151, %v2251
        %v2262 = vadd.f32 %v2152, %v2253
        %v2263 = vld [vmem:[%s1640] sm:$0xf]
        %v2264 = vld [vmem:[%s1640 + $0x4] sm:$0x1]
        %v2265 = vld [vmem:[%s1640 + $0x8] sm:$0xf]
        %v2266 = vld [vmem:[%s1640 + $0xc] sm:$0x1]
        %v2267 = vld [vmem:[%s1640 + $0x10] sm:$0xf]
        %v2268 = vld [vmem:[%s1640 + $0x14] sm:$0x1]
        %v2269 = vld [vmem:[%s1640 + $0x18] sm:$0xf]
        %v2270 = vld [vmem:[%s1640 + $0x1c] sm:$0x1]
        %v2271 = vld [vmem:[%s1640 + $0x20] sm:$0xf]
        %v2272 = vld [vmem:[%s1640 + $0x24] sm:$0x1]
        %v2273 = vld [vmem:[%s1640 + $0x28] sm:$0xf]
        %v2274 = vld [vmem:[%s1640 + $0x2c] sm:$0x1]
        %v2275 = vld [vmem:[%s1640 + $0x30] sm:$0xf]
        %v2276 = vld [vmem:[%s1640 + $0x34] sm:$0x1]
        %v2277 = vld [vmem:[%s1640 + $0x38] sm:$0xf]
        %v2278 = vld [vmem:[%s1640 + $0x3c] sm:$0x1]
        %v2280 = vshrl.u32 %v2263, 16
        %v2282 = vrot.slane %v2280, 4
        %v2283 = vshll.u32 %v2263, 16
        %v2285 = vrot.slane %v2283, 5
        %v2286 = vor.u32 %v2282, %v2285
        %v2287 = vrot.slane %v2286, 4
        %v2289 = vshll.u32 %v2264, 16
        %v2291 = vrot.slane %v2289, 5
        %v2292 = vsel %vm246, %v2287, %v2291
        %v2294 = vshrl.u32 %v2265, 16
        %v2296 = vrot.slane %v2294, 4
        %v2297 = vshll.u32 %v2265, 16
        %v2299 = vrot.slane %v2297, 5
        %v2300 = vor.u32 %v2296, %v2299
        %v2301 = vrot.slane %v2300, 4
        %v2303 = vshll.u32 %v2266, 16
        %v2305 = vrot.slane %v2303, 5
        %v2306 = vsel %vm246, %v2301, %v2305
        %v2308 = vshrl.u32 %v2267, 16
        %v2310 = vrot.slane %v2308, 4
        %v2311 = vshll.u32 %v2267, 16
        %v2313 = vrot.slane %v2311, 5
        %v2314 = vor.u32 %v2310, %v2313
        %v2315 = vrot.slane %v2314, 4
        %v2317 = vshll.u32 %v2268, 16
        %v2319 = vrot.slane %v2317, 5
        %v2320 = vsel %vm246, %v2315, %v2319
        %v2322 = vshrl.u32 %v2269, 16
        %v2324 = vrot.slane %v2322, 4
        %v2325 = vshll.u32 %v2269, 16
        %v2327 = vrot.slane %v2325, 5
        %v2328 = vor.u32 %v2324, %v2327
        %v2329 = vrot.slane %v2328, 4
        %v2331 = vshll.u32 %v2270, 16
        %v2333 = vrot.slane %v2331, 5
        %v2334 = vsel %vm246, %v2329, %v2333
        %v2336 = vshrl.u32 %v2271, 16
        %v2338 = vrot.slane %v2336, 4
        %v2339 = vshll.u32 %v2271, 16
        %v2341 = vrot.slane %v2339, 5
        %v2342 = vor.u32 %v2338, %v2341
        %v2343 = vrot.slane %v2342, 4
        %v2345 = vshll.u32 %v2272, 16
        %v2347 = vrot.slane %v2345, 5
        %v2348 = vsel %vm246, %v2343, %v2347
        %v2350 = vshrl.u32 %v2273, 16
        %v2352 = vrot.slane %v2350, 4
        %v2353 = vshll.u32 %v2273, 16
        %v2355 = vrot.slane %v2353, 5
        %v2356 = vor.u32 %v2352, %v2355
        %v2357 = vrot.slane %v2356, 4
        %v2359 = vshll.u32 %v2274, 16
        %v2361 = vrot.slane %v2359, 5
        %v2362 = vsel %vm246, %v2357, %v2361
        %v2364 = vshrl.u32 %v2275, 16
        %v2366 = vrot.slane %v2364, 4
        %v2367 = vshll.u32 %v2275, 16
        %v2369 = vrot.slane %v2367, 5
        %v2370 = vor.u32 %v2366, %v2369
        %v2371 = vrot.slane %v2370, 4
        %v2373 = vshll.u32 %v2276, 16
        %v2375 = vrot.slane %v2373, 5
        %v2376 = vsel %vm246, %v2371, %v2375
        %v2378 = vshrl.u32 %v2277, 16
        %v2380 = vrot.slane %v2378, 4
        %v2381 = vshll.u32 %v2277, 16
        %v2383 = vrot.slane %v2381, 5
        %v2384 = vor.u32 %v2380, %v2383
        %v2385 = vrot.slane %v2384, 4
        %v2387 = vshll.u32 %v2278, 16
        %v2389 = vrot.slane %v2387, 5
        %v2390 = vsel %vm246, %v2385, %v2389
        %s2391 = scalar_lea.vmem %s3, 128
        %v2392 = vld [vmem:[%s2391] sm:$0xf]
        %v2393 = vld [vmem:[%s2391 + $0x4] sm:$0xf]
        %v2394 = vld [vmem:[%s2391 + $0x8] sm:$0xf]
        %v2395 = vld [vmem:[%s2391 + $0xc] sm:$0xf]
        %v2396 = vld [vmem:[%s2391 + $0x10] sm:$0xf]
        %v2397 = vld [vmem:[%s2391 + $0x14] sm:$0xf]
        %v2398 = vld [vmem:[%s2391 + $0x18] sm:$0xf]
        %v2399 = vld [vmem:[%s2391 + $0x1c] sm:$0xf]
        %v2400 = vunpack.c.l.b16 %v2292
        %v2401 = vunpack.c.l.b16 %v2306
        %v2402 = vunpack.c.l.b16 %v2320
        %v2403 = vunpack.c.l.b16 %v2334
        %v2404 = vunpack.c.l.b16 %v2348
        %v2405 = vunpack.c.l.b16 %v2362
        %v2406 = vunpack.c.l.b16 %v2376
        %v2407 = vunpack.c.l.b16 %v2390
        %v2408 = vpack.c.b16 %v2401, %v2400
        %v2409 = vpack.c.b16 %v2403, %v2402
        %v2410 = vpack.c.b16 %v2405, %v2404
        %v2411 = vpack.c.b16 %v2407, %v2406
        %v2420 = vunpack.c.l.b16 %v2392
        %v2421 = vunpack.c.l.b16 %v2393
        %v2422 = vunpack.c.l.b16 %v2394
        %v2423 = vunpack.c.l.b16 %v2395
        %v2424 = vunpack.c.l.b16 %v2396
        %v2425 = vunpack.c.l.b16 %v2397
        %v2426 = vunpack.c.l.b16 %v2398
        %v2427 = vunpack.c.l.b16 %v2399
        %v2428 = vpack.c.b16 %v2421, %v2420
        %v2429 = vpack.c.b16 %v2423, %v2422
        %v2430 = vpack.c.b16 %v2425, %v2424
        %v2431 = vpack.c.b16 %v2427, %v2426
        %v2437 = vsel %vm1876, %v2408, 0
        %v2440 = vsel %vm1876, %v2409, 0
        %v2443 = vsel %vm1876, %v2410, 0
        %v2446 = vsel %vm1876, %v2411, 0
        %2448 = vmatpush.bf16.msra.mxu0 0
        %2449 = vmatpush.bf16.msra.mxu0 0
        %2450 = vmatpush.bf16.msra.mxu0 0
        %2451 = vmatpush.bf16.msra.mxu0 0
        %2452 = vmatpush.bf16.msra.mxu0 %v2431
        %2453 = vmatpush.bf16.msra.mxu0 %v2430
        %2454 = vmatpush.bf16.msra.mxu0 %v2429
        %2455 = vmatpush.bf16.msra.mxu0 %v2428
        %2456 = vmatmul.bf16.gmra.mxu0 %v2437
        %v2457 = vpop.f32.mrf.mxu0
        %v2458 = vadd.f32 0.0, %v2457
        %v2459 = vpop.f32.mrf.mxu0
        %v2460 = vadd.f32 0.0, %v2459
        %2461 = vmatmul.bf16.gmra.mxu0 %v2440
        %v2462 = vpop.f32.mrf.mxu0
        %v2463 = vadd.f32 0.0, %v2462
        %v2464 = vpop.f32.mrf.mxu0
        %v2465 = vadd.f32 0.0, %v2464
        %2466 = vmatmul.bf16.gmra.mxu0 %v2443
        %v2467 = vpop.f32.mrf.mxu0
        %v2468 = vadd.f32 0.0, %v2467
        %v2469 = vpop.f32.mrf.mxu0
        %v2470 = vadd.f32 0.0, %v2469
        %2471 = vmatmul.bf16.gmra.mxu0 %v2446
        %v2472 = vpop.f32.mrf.mxu0
        %v2473 = vadd.f32 0.0, %v2472
        %v2474 = vpop.f32.mrf.mxu0
        %v2475 = vadd.f32 0.0, %v2474
        %2476 = vdwg.mxu0
        %v2477 = vadd.f32 %v2255, %v2458
        %v2478 = vadd.f32 %v2256, %v2460
        %v2479 = vadd.f32 %v2257, %v2463
        %v2480 = vadd.f32 %v2258, %v2465
        %v2481 = vadd.f32 %v2259, %v2468
        %v2482 = vadd.f32 %v2260, %v2470
        %v2483 = vadd.f32 %v2261, %v2473
        %v2484 = vadd.f32 %v2262, %v2475
        %v2485 = vld [vmem:[%s1640] sm:$0xe]
        %v2486 = vld [vmem:[%s1640 + $0x8] sm:$0xe]
        %v2487 = vld [vmem:[%s1640 + $0x10] sm:$0xe]
        %v2488 = vld [vmem:[%s1640 + $0x18] sm:$0xe]
        %v2489 = vld [vmem:[%s1640 + $0x20] sm:$0xe]
        %v2490 = vld [vmem:[%s1640 + $0x28] sm:$0xe]
        %v2491 = vld [vmem:[%s1640 + $0x30] sm:$0xe]
        %v2492 = vld [vmem:[%s1640 + $0x38] sm:$0xe]
        %v2509 = vrot.slane %v2485, 5
        %v2510 = vrot.slane %v2509, 4
        %v2511 = vrot.slane %v2264, 5
        %v2512 = vsel %vm529, %v2510, %v2511
        %v2513 = vrot.slane %v2486, 5
        %v2514 = vrot.slane %v2513, 4
        %v2515 = vrot.slane %v2266, 5
        %v2516 = vsel %vm529, %v2514, %v2515
        %v2517 = vrot.slane %v2487, 5
        %v2518 = vrot.slane %v2517, 4
        %v2519 = vrot.slane %v2268, 5
        %v2520 = vsel %vm529, %v2518, %v2519
        %v2521 = vrot.slane %v2488, 5
        %v2522 = vrot.slane %v2521, 4
        %v2523 = vrot.slane %v2270, 5
        %v2524 = vsel %vm529, %v2522, %v2523
        %v2525 = vrot.slane %v2489, 5
        %v2526 = vrot.slane %v2525, 4
        %v2527 = vrot.slane %v2272, 5
        %v2528 = vsel %vm529, %v2526, %v2527
        %v2529 = vrot.slane %v2490, 5
        %v2530 = vrot.slane %v2529, 4
        %v2531 = vrot.slane %v2274, 5
        %v2532 = vsel %vm529, %v2530, %v2531
        %v2533 = vrot.slane %v2491, 5
        %v2534 = vrot.slane %v2533, 4
        %v2535 = vrot.slane %v2276, 5
        %v2536 = vsel %vm529, %v2534, %v2535
        %v2537 = vrot.slane %v2492, 5
        %v2538 = vrot.slane %v2537, 4
        %v2539 = vrot.slane %v2278, 5
        %v2540 = vsel %vm529, %v2538, %v2539
        %s2541 = scalar_lea.vmem %s3, 160
        %v2542 = vld [vmem:[%s2541] sm:$0xf]
        %v2543 = vld [vmem:[%s2541 + $0x4] sm:$0xf]
        %v2544 = vld [vmem:[%s2541 + $0x8] sm:$0xf]
        %v2545 = vld [vmem:[%s2541 + $0xc] sm:$0xf]
        %v2546 = vld [vmem:[%s2541 + $0x10] sm:$0xf]
        %v2547 = vld [vmem:[%s2541 + $0x14] sm:$0xf]
        %v2548 = vld [vmem:[%s2541 + $0x18] sm:$0xf]
        %v2549 = vld [vmem:[%s2541 + $0x1c] sm:$0xf]
        %v2550 = vunpack.c.l.b16 %v2512
        %v2551 = vunpack.c.l.b16 %v2516
        %v2552 = vunpack.c.l.b16 %v2520
        %v2553 = vunpack.c.l.b16 %v2524
        %v2554 = vunpack.c.l.b16 %v2528
        %v2555 = vunpack.c.l.b16 %v2532
        %v2556 = vunpack.c.l.b16 %v2536
        %v2557 = vunpack.c.l.b16 %v2540
        %v2558 = vpack.c.b16 %v2551, %v2550
        %v2559 = vpack.c.b16 %v2553, %v2552
        %v2560 = vpack.c.b16 %v2555, %v2554
        %v2561 = vpack.c.b16 %v2557, %v2556
        %v2570 = vunpack.c.l.b16 %v2542
        %v2571 = vunpack.c.l.b16 %v2543
        %v2572 = vunpack.c.l.b16 %v2544
        %v2573 = vunpack.c.l.b16 %v2545
        %v2574 = vunpack.c.l.b16 %v2546
        %v2575 = vunpack.c.l.b16 %v2547
        %v2576 = vunpack.c.l.b16 %v2548
        %v2577 = vunpack.c.l.b16 %v2549
        %v2578 = vpack.c.b16 %v2571, %v2570
        %v2579 = vpack.c.b16 %v2573, %v2572
        %v2580 = vpack.c.b16 %v2575, %v2574
        %v2581 = vpack.c.b16 %v2577, %v2576
        %v2587 = vsel %vm1876, %v2558, 0
        %v2590 = vsel %vm1876, %v2559, 0
        %v2593 = vsel %vm1876, %v2560, 0
        %v2596 = vsel %vm1876, %v2561, 0
        %2598 = vmatpush.bf16.msra.mxu0 0
        %2599 = vmatpush.bf16.msra.mxu0 0
        %2600 = vmatpush.bf16.msra.mxu0 0
        %2601 = vmatpush.bf16.msra.mxu0 0
        %2602 = vmatpush.bf16.msra.mxu0 %v2581
        %2603 = vmatpush.bf16.msra.mxu0 %v2580
        %2604 = vmatpush.bf16.msra.mxu0 %v2579
        %2605 = vmatpush.bf16.msra.mxu0 %v2578
        %2606 = vmatmul.bf16.gmra.mxu0 %v2587
        %v2607 = vpop.f32.mrf.mxu0
        %v2608 = vadd.f32 0.0, %v2607
        %v2609 = vpop.f32.mrf.mxu0
        %v2610 = vadd.f32 0.0, %v2609
        %2611 = vmatmul.bf16.gmra.mxu0 %v2590
        %v2612 = vpop.f32.mrf.mxu0
        %v2613 = vadd.f32 0.0, %v2612
        %v2614 = vpop.f32.mrf.mxu0
        %v2615 = vadd.f32 0.0, %v2614
        %2616 = vmatmul.bf16.gmra.mxu0 %v2593
        %v2617 = vpop.f32.mrf.mxu0
        %v2618 = vadd.f32 0.0, %v2617
        %v2619 = vpop.f32.mrf.mxu0
        %v2620 = vadd.f32 0.0, %v2619
        %2621 = vmatmul.bf16.gmra.mxu0 %v2596
        %v2622 = vpop.f32.mrf.mxu0
        %v2623 = vadd.f32 0.0, %v2622
        %v2624 = vpop.f32.mrf.mxu0
        %v2625 = vadd.f32 0.0, %v2624
        %2626 = vdwg.mxu0
        %v2627 = vadd.f32 %v2477, %v2608
        %v2628 = vadd.f32 %v2478, %v2610
        %v2629 = vadd.f32 %v2479, %v2613
        %v2630 = vadd.f32 %v2480, %v2615
        %v2631 = vadd.f32 %v2481, %v2618
        %v2632 = vadd.f32 %v2482, %v2620
        %v2633 = vadd.f32 %v2483, %v2623
        %v2634 = vadd.f32 %v2484, %v2625
        %s2635 = scalar_lea.vmem [#allocation2], 16
        %v2636 = vld [vmem:[%s2635] sm:$0xf]
        %v2637 = vld [vmem:[%s2635 + $0x8] sm:$0xf]
        %v2638 = vld [vmem:[%s2635 + $0x10] sm:$0xf]
        %v2639 = vld [vmem:[%s2635 + $0x18] sm:$0xf]
        %v2640 = vld [vmem:[%s2635 + $0x20] sm:$0xf]
        %v2641 = vld [vmem:[%s2635 + $0x28] sm:$0xf]
        %v2642 = vld [vmem:[%s2635 + $0x30] sm:$0xf]
        %v2643 = vld [vmem:[%s2635 + $0x38] sm:$0xf]
        %s2644 = scalar_lea.vmem %s3, 192
        %v2645 = vld [vmem:[%s2644] sm:$0xf]
        %v2646 = vld [vmem:[%s2644 + $0x4] sm:$0xf]
        %v2647 = vld [vmem:[%s2644 + $0x8] sm:$0xf]
        %v2648 = vld [vmem:[%s2644 + $0xc] sm:$0xf]
        %v2649 = vld [vmem:[%s2644 + $0x10] sm:$0xf]
        %v2650 = vld [vmem:[%s2644 + $0x14] sm:$0xf]
        %v2651 = vld [vmem:[%s2644 + $0x18] sm:$0xf]
        %v2652 = vld [vmem:[%s2644 + $0x1c] sm:$0xf]
        %v2661 = vunpack.c.l.b16 %v2636
        %v2662 = vunpack.c.l.b16 %v2637
        %v2663 = vunpack.c.l.b16 %v2638
        %v2664 = vunpack.c.l.b16 %v2639
        %v2665 = vunpack.c.l.b16 %v2640
        %v2666 = vunpack.c.l.b16 %v2641
        %v2667 = vunpack.c.l.b16 %v2642
        %v2668 = vunpack.c.l.b16 %v2643
        %v2669 = vpack.c.b16 %v2662, %v2661
        %v2670 = vpack.c.b16 %v2664, %v2663
        %v2671 = vpack.c.b16 %v2666, %v2665
        %v2672 = vpack.c.b16 %v2668, %v2667
        %v2681 = vunpack.c.l.b16 %v2645
        %v2682 = vunpack.c.l.b16 %v2646
        %v2683 = vunpack.c.l.b16 %v2647
        %v2684 = vunpack.c.l.b16 %v2648
        %v2685 = vunpack.c.l.b16 %v2649
        %v2686 = vunpack.c.l.b16 %v2650
        %v2687 = vunpack.c.l.b16 %v2651
        %v2688 = vunpack.c.l.b16 %v2652
        %v2689 = vpack.c.b16 %v2682, %v2681
        %v2690 = vpack.c.b16 %v2684, %v2683
        %v2691 = vpack.c.b16 %v2686, %v2685
        %v2692 = vpack.c.b16 %v2688, %v2687
        %v2698 = vsel %vm1876, %v2669, 0
        %v2701 = vsel %vm1876, %v2670, 0
        %v2704 = vsel %vm1876, %v2671, 0
        %v2707 = vsel %vm1876, %v2672, 0
        %2709 = vmatpush.bf16.msra.mxu0 0
        %2710 = vmatpush.bf16.msra.mxu0 0
        %2711 = vmatpush.bf16.msra.mxu0 0
        %2712 = vmatpush.bf16.msra.mxu0 0
        %2713 = vmatpush.bf16.msra.mxu0 %v2692
        %2714 = vmatpush.bf16.msra.mxu0 %v2691
        %2715 = vmatpush.bf16.msra.mxu0 %v2690
        %2716 = vmatpush.bf16.msra.mxu0 %v2689
        %2717 = vmatmul.bf16.gmra.mxu0 %v2698
        %v2718 = vpop.f32.mrf.mxu0
        %v2719 = vadd.f32 0.0, %v2718
        %v2720 = vpop.f32.mrf.mxu0
        %v2721 = vadd.f32 0.0, %v2720
        %2722 = vmatmul.bf16.gmra.mxu0 %v2701
        %v2723 = vpop.f32.mrf.mxu0
        %v2724 = vadd.f32 0.0, %v2723
        %v2725 = vpop.f32.mrf.mxu0
        %v2726 = vadd.f32 0.0, %v2725
        %2727 = vmatmul.bf16.gmra.mxu0 %v2704
        %v2728 = vpop.f32.mrf.mxu0
        %v2729 = vadd.f32 0.0, %v2728
        %v2730 = vpop.f32.mrf.mxu0
        %v2731 = vadd.f32 0.0, %v2730
        %2732 = vmatmul.bf16.gmra.mxu0 %v2707
        %v2733 = vpop.f32.mrf.mxu0
        %v2734 = vadd.f32 0.0, %v2733
        %v2735 = vpop.f32.mrf.mxu0
        %v2736 = vadd.f32 0.0, %v2735
        %2737 = vdwg.mxu0
        %v2738 = vadd.f32 %v2627, %v2719
        %v2739 = vadd.f32 %v2628, %v2721
        %v2740 = vadd.f32 %v2629, %v2724
        %v2741 = vadd.f32 %v2630, %v2726
        %v2742 = vadd.f32 %v2631, %v2729
        %v2743 = vadd.f32 %v2632, %v2731
        %v2744 = vadd.f32 %v2633, %v2734
        %v2745 = vadd.f32 %v2634, %v2736
        %v2746 = vld [vmem:[%s2635] sm:$0xf]
        %v2747 = vld [vmem:[%s2635 + $0x4] sm:$0x1]
        %v2748 = vld [vmem:[%s2635 + $0x8] sm:$0xf]
        %v2749 = vld [vmem:[%s2635 + $0xc] sm:$0x1]
        %v2750 = vld [vmem:[%s2635 + $0x10] sm:$0xf]
        %v2751 = vld [vmem:[%s2635 + $0x14] sm:$0x1]
        %v2752 = vld [vmem:[%s2635 + $0x18] sm:$0xf]
        %v2753 = vld [vmem:[%s2635 + $0x1c] sm:$0x1]
        %v2754 = vld [vmem:[%s2635 + $0x20] sm:$0xf]
        %v2755 = vld [vmem:[%s2635 + $0x24] sm:$0x1]
        %v2756 = vld [vmem:[%s2635 + $0x28] sm:$0xf]
        %v2757 = vld [vmem:[%s2635 + $0x2c] sm:$0x1]
        %v2758 = vld [vmem:[%s2635 + $0x30] sm:$0xf]
        %v2759 = vld [vmem:[%s2635 + $0x34] sm:$0x1]
        %v2760 = vld [vmem:[%s2635 + $0x38] sm:$0xf]
        %v2761 = vld [vmem:[%s2635 + $0x3c] sm:$0x1]
        %v2763 = vshrl.u32 %v2746, 16
        %v2765 = vrot.slane %v2763, 4
        %v2766 = vshll.u32 %v2746, 16
        %v2768 = vrot.slane %v2766, 5
        %v2769 = vor.u32 %v2765, %v2768
        %v2770 = vrot.slane %v2769, 4
        %v2772 = vshll.u32 %v2747, 16
        %v2774 = vrot.slane %v2772, 5
        %v2775 = vsel %vm246, %v2770, %v2774
        %v2777 = vshrl.u32 %v2748, 16
        %v2779 = vrot.slane %v2777, 4
        %v2780 = vshll.u32 %v2748, 16
        %v2782 = vrot.slane %v2780, 5
        %v2783 = vor.u32 %v2779, %v2782
        %v2784 = vrot.slane %v2783, 4
        %v2786 = vshll.u32 %v2749, 16
        %v2788 = vrot.slane %v2786, 5
        %v2789 = vsel %vm246, %v2784, %v2788
        %v2791 = vshrl.u32 %v2750, 16
        %v2793 = vrot.slane %v2791, 4
        %v2794 = vshll.u32 %v2750, 16
        %v2796 = vrot.slane %v2794, 5
        %v2797 = vor.u32 %v2793, %v2796
        %v2798 = vrot.slane %v2797, 4
        %v2800 = vshll.u32 %v2751, 16
        %v2802 = vrot.slane %v2800, 5
        %v2803 = vsel %vm246, %v2798, %v2802
        %v2805 = vshrl.u32 %v2752, 16
        %v2807 = vrot.slane %v2805, 4
        %v2808 = vshll.u32 %v2752, 16
        %v2810 = vrot.slane %v2808, 5
        %v2811 = vor.u32 %v2807, %v2810
        %v2812 = vrot.slane %v2811, 4
        %v2814 = vshll.u32 %v2753, 16
        %v2816 = vrot.slane %v2814, 5
        %v2817 = vsel %vm246, %v2812, %v2816
        %v2819 = vshrl.u32 %v2754, 16
        %v2821 = vrot.slane %v2819, 4
        %v2822 = vshll.u32 %v2754, 16
        %v2824 = vrot.slane %v2822, 5
        %v2825 = vor.u32 %v2821, %v2824
        %v2826 = vrot.slane %v2825, 4
        %v2828 = vshll.u32 %v2755, 16
        %v2830 = vrot.slane %v2828, 5
        %v2831 = vsel %vm246, %v2826, %v2830
        %v2833 = vshrl.u32 %v2756, 16
        %v2835 = vrot.slane %v2833, 4
        %v2836 = vshll.u32 %v2756, 16
        %v2838 = vrot.slane %v2836, 5
        %v2839 = vor.u32 %v2835, %v2838
        %v2840 = vrot.slane %v2839, 4
        %v2842 = vshll.u32 %v2757, 16
        %v2844 = vrot.slane %v2842, 5
        %v2845 = vsel %vm246, %v2840, %v2844
        %v2847 = vshrl.u32 %v2758, 16
        %v2849 = vrot.slane %v2847, 4
        %v2850 = vshll.u32 %v2758, 16
        %v2852 = vrot.slane %v2850, 5
        %v2853 = vor.u32 %v2849, %v2852
        %v2854 = vrot.slane %v2853, 4
        %v2856 = vshll.u32 %v2759, 16
        %v2858 = vrot.slane %v2856, 5
        %v2859 = vsel %vm246, %v2854, %v2858
        %v2861 = vshrl.u32 %v2760, 16
        %v2863 = vrot.slane %v2861, 4
        %v2864 = vshll.u32 %v2760, 16
        %v2866 = vrot.slane %v2864, 5
        %v2867 = vor.u32 %v2863, %v2866
        %v2868 = vrot.slane %v2867, 4
        %v2870 = vshll.u32 %v2761, 16
        %v2872 = vrot.slane %v2870, 5
        %v2873 = vsel %vm246, %v2868, %v2872
        %s2874 = scalar_lea.vmem %s3, 224
        %v2875 = vld [vmem:[%s2874] sm:$0xf]
        %v2876 = vld [vmem:[%s2874 + $0x4] sm:$0xf]
        %v2877 = vld [vmem:[%s2874 + $0x8] sm:$0xf]
        %v2878 = vld [vmem:[%s2874 + $0xc] sm:$0xf]
        %v2879 = vld [vmem:[%s2874 + $0x10] sm:$0xf]
        %v2880 = vld [vmem:[%s2874 + $0x14] sm:$0xf]
        %v2881 = vld [vmem:[%s2874 + $0x18] sm:$0xf]
        %v2882 = vld [vmem:[%s2874 + $0x1c] sm:$0xf]
        %v2883 = vunpack.c.l.b16 %v2775
        %v2884 = vunpack.c.l.b16 %v2789
        %v2885 = vunpack.c.l.b16 %v2803
        %v2886 = vunpack.c.l.b16 %v2817
        %v2887 = vunpack.c.l.b16 %v2831
        %v2888 = vunpack.c.l.b16 %v2845
        %v2889 = vunpack.c.l.b16 %v2859
        %v2890 = vunpack.c.l.b16 %v2873
        %v2891 = vpack.c.b16 %v2884, %v2883
        %v2892 = vpack.c.b16 %v2886, %v2885
        %v2893 = vpack.c.b16 %v2888, %v2887
        %v2894 = vpack.c.b16 %v2890, %v2889
        %v2903 = vunpack.c.l.b16 %v2875
        %v2904 = vunpack.c.l.b16 %v2876
        %v2905 = vunpack.c.l.b16 %v2877
        %v2906 = vunpack.c.l.b16 %v2878
        %v2907 = vunpack.c.l.b16 %v2879
        %v2908 = vunpack.c.l.b16 %v2880
        %v2909 = vunpack.c.l.b16 %v2881
        %v2910 = vunpack.c.l.b16 %v2882
        %v2911 = vpack.c.b16 %v2904, %v2903
        %v2912 = vpack.c.b16 %v2906, %v2905
        %v2913 = vpack.c.b16 %v2908, %v2907
        %v2914 = vpack.c.b16 %v2910, %v2909
        %v2920 = vsel %vm1876, %v2891, 0
        %v2923 = vsel %vm1876, %v2892, 0
        %v2926 = vsel %vm1876, %v2893, 0
        %v2929 = vsel %vm1876, %v2894, 0
        %2931 = vmatpush.bf16.msra.mxu0 0
        %2932 = vmatpush.bf16.msra.mxu0 0
        %2933 = vmatpush.bf16.msra.mxu0 0
        %2934 = vmatpush.bf16.msra.mxu0 0
        %2935 = vmatpush.bf16.msra.mxu0 %v2914
        %2936 = vmatpush.bf16.msra.mxu0 %v2913
        %2937 = vmatpush.bf16.msra.mxu0 %v2912
        %2938 = vmatpush.bf16.msra.mxu0 %v2911
        %2939 = vmatmul.bf16.gmra.mxu0 %v2920
        %v2940 = vpop.f32.mrf.mxu0
        %v2941 = vadd.f32 0.0, %v2940
        %v2942 = vpop.f32.mrf.mxu0
        %v2943 = vadd.f32 0.0, %v2942
        %2944 = vmatmul.bf16.gmra.mxu0 %v2923
        %v2945 = vpop.f32.mrf.mxu0
        %v2946 = vadd.f32 0.0, %v2945
        %v2947 = vpop.f32.mrf.mxu0
        %v2948 = vadd.f32 0.0, %v2947
        %2949 = vmatmul.bf16.gmra.mxu0 %v2926
        %v2950 = vpop.f32.mrf.mxu0
        %v2951 = vadd.f32 0.0, %v2950
        %v2952 = vpop.f32.mrf.mxu0
        %v2953 = vadd.f32 0.0, %v2952
        %2954 = vmatmul.bf16.gmra.mxu0 %v2929
        %v2955 = vpop.f32.mrf.mxu0
        %v2956 = vadd.f32 0.0, %v2955
        %v2957 = vpop.f32.mrf.mxu0
        %v2958 = vadd.f32 0.0, %v2957
        %2959 = vdwg.mxu0
        %v2960 = vadd.f32 %v2738, %v2941
        %v2961 = vadd.f32 %v2739, %v2943
        %v2962 = vadd.f32 %v2740, %v2946
        %v2963 = vadd.f32 %v2741, %v2948
        %v2964 = vadd.f32 %v2742, %v2951
        %v2965 = vadd.f32 %v2743, %v2953
        %v2966 = vadd.f32 %v2744, %v2956
        %v2967 = vadd.f32 %v2745, %v2958
        %v2968 = vld [vmem:[%s2635] sm:$0xe]
        %v2969 = vld [vmem:[%s2635 + $0x8] sm:$0xe]
        %v2970 = vld [vmem:[%s2635 + $0x10] sm:$0xe]
        %v2971 = vld [vmem:[%s2635 + $0x18] sm:$0xe]
        %v2972 = vld [vmem:[%s2635 + $0x20] sm:$0xe]
        %v2973 = vld [vmem:[%s2635 + $0x28] sm:$0xe]
        %v2974 = vld [vmem:[%s2635 + $0x30] sm:$0xe]
        %v2975 = vld [vmem:[%s2635 + $0x38] sm:$0xe]
        %v2992 = vrot.slane %v2968, 5
        %v2993 = vrot.slane %v2992, 4
        %v2994 = vrot.slane %v2747, 5
        %v2995 = vsel %vm529, %v2993, %v2994
        %v2996 = vrot.slane %v2969, 5
        %v2997 = vrot.slane %v2996, 4
        %v2998 = vrot.slane %v2749, 5
        %v2999 = vsel %vm529, %v2997, %v2998
        %v3000 = vrot.slane %v2970, 5
        %v3001 = vrot.slane %v3000, 4
        %v3002 = vrot.slane %v2751, 5
        %v3003 = vsel %vm529, %v3001, %v3002
        %v3004 = vrot.slane %v2971, 5
        %v3005 = vrot.slane %v3004, 4
        %v3006 = vrot.slane %v2753, 5
        %v3007 = vsel %vm529, %v3005, %v3006
        %v3008 = vrot.slane %v2972, 5
        %v3009 = vrot.slane %v3008, 4
        %v3010 = vrot.slane %v2755, 5
        %v3011 = vsel %vm529, %v3009, %v3010
        %v3012 = vrot.slane %v2973, 5
        %v3013 = vrot.slane %v3012, 4
        %v3014 = vrot.slane %v2757, 5
        %v3015 = vsel %vm529, %v3013, %v3014
        %v3016 = vrot.slane %v2974, 5
        %v3017 = vrot.slane %v3016, 4
        %v3018 = vrot.slane %v2759, 5
        %v3019 = vsel %vm529, %v3017, %v3018
        %v3020 = vrot.slane %v2975, 5
        %v3021 = vrot.slane %v3020, 4
        %v3022 = vrot.slane %v2761, 5
        %v3023 = vsel %vm529, %v3021, %v3022
        %s3024 = scalar_lea.vmem %s3, 256
        %v3025 = vld [vmem:[%s3024] sm:$0xf]
        %v3026 = vld [vmem:[%s3024 + $0x4] sm:$0xf]
        %v3027 = vld [vmem:[%s3024 + $0x8] sm:$0xf]
        %v3028 = vld [vmem:[%s3024 + $0xc] sm:$0xf]
        %v3029 = vld [vmem:[%s3024 + $0x10] sm:$0xf]
        %v3030 = vld [vmem:[%s3024 + $0x14] sm:$0xf]
        %v3031 = vld [vmem:[%s3024 + $0x18] sm:$0xf]
        %v3032 = vld [vmem:[%s3024 + $0x1c] sm:$0xf]
        %v3033 = vunpack.c.l.b16 %v2995
        %v3034 = vunpack.c.l.b16 %v2999
        %v3035 = vunpack.c.l.b16 %v3003
        %v3036 = vunpack.c.l.b16 %v3007
        %v3037 = vunpack.c.l.b16 %v3011
        %v3038 = vunpack.c.l.b16 %v3015
        %v3039 = vunpack.c.l.b16 %v3019
        %v3040 = vunpack.c.l.b16 %v3023
        %v3041 = vpack.c.b16 %v3034, %v3033
        %v3042 = vpack.c.b16 %v3036, %v3035
        %v3043 = vpack.c.b16 %v3038, %v3037
        %v3044 = vpack.c.b16 %v3040, %v3039
        %v3053 = vunpack.c.l.b16 %v3025
        %v3054 = vunpack.c.l.b16 %v3026
        %v3055 = vunpack.c.l.b16 %v3027
        %v3056 = vunpack.c.l.b16 %v3028
        %v3057 = vunpack.c.l.b16 %v3029
        %v3058 = vunpack.c.l.b16 %v3030
        %v3059 = vunpack.c.l.b16 %v3031
        %v3060 = vunpack.c.l.b16 %v3032
        %v3061 = vpack.c.b16 %v3054, %v3053
        %v3062 = vpack.c.b16 %v3056, %v3055
        %v3063 = vpack.c.b16 %v3058, %v3057
        %v3064 = vpack.c.b16 %v3060, %v3059
        %v3070 = vsel %vm1876, %v3041, 0
        %v3073 = vsel %vm1876, %v3042, 0
        %v3076 = vsel %vm1876, %v3043, 0
        %v3079 = vsel %vm1876, %v3044, 0
        %3081 = vmatpush.bf16.msra.mxu0 0
        %3082 = vmatpush.bf16.msra.mxu0 0
        %3083 = vmatpush.bf16.msra.mxu0 0
        %3084 = vmatpush.bf16.msra.mxu0 0
        %3085 = vmatpush.bf16.msra.mxu0 %v3064
        %3086 = vmatpush.bf16.msra.mxu0 %v3063
        %3087 = vmatpush.bf16.msra.mxu0 %v3062
        %3088 = vmatpush.bf16.msra.mxu0 %v3061
        %3089 = vmatmul.bf16.gmra.mxu0 %v3070
        %v3090 = vpop.f32.mrf.mxu0
        %v3091 = vadd.f32 0.0, %v3090
        %v3092 = vpop.f32.mrf.mxu0
        %v3093 = vadd.f32 0.0, %v3092
        %3094 = vmatmul.bf16.gmra.mxu0 %v3073
        %v3095 = vpop.f32.mrf.mxu0
        %v3096 = vadd.f32 0.0, %v3095
        %v3097 = vpop.f32.mrf.mxu0
        %v3098 = vadd.f32 0.0, %v3097
        %3099 = vmatmul.bf16.gmra.mxu0 %v3076
        %v3100 = vpop.f32.mrf.mxu0
        %v3101 = vadd.f32 0.0, %v3100
        %v3102 = vpop.f32.mrf.mxu0
        %v3103 = vadd.f32 0.0, %v3102
        %3104 = vmatmul.bf16.gmra.mxu0 %v3079
        %v3105 = vpop.f32.mrf.mxu0
        %v3106 = vadd.f32 0.0, %v3105
        %v3107 = vpop.f32.mrf.mxu0
        %v3108 = vadd.f32 0.0, %v3107
        %3109 = vdwg.mxu0
        %v3110 = vadd.f32 %v2960, %v3091
        %v3111 = vadd.f32 %v2961, %v3093
        %v3112 = vadd.f32 %v2962, %v3096
        %v3113 = vadd.f32 %v2963, %v3098
        %v3114 = vadd.f32 %v2964, %v3101
        %v3115 = vadd.f32 %v2965, %v3103
        %v3116 = vadd.f32 %v2966, %v3106
        %v3117 = vadd.f32 %v2967, %v3108
        %v3118 = vld [vmem:[%s4] sm:$0x1]
        %v3120 = vperm.slane %v3118, 0
        %v3122 = vadd.f32 %v3110, %v3120
        %v3123 = vadd.f32 %v3111, %v3120
        %v3124 = vadd.f32 %v3112, %v3120
        %v3125 = vadd.f32 %v3113, %v3120
        %v3126 = vadd.f32 %v3114, %v3120
        %v3127 = vadd.f32 %v3115, %v3120
        %v3128 = vadd.f32 %v3116, %v3120
        %v3129 = vadd.f32 %v3117, %v3120
        %v3130 = vmax.f32 %v3122, 0.0
        %v3131 = vmax.f32 %v3123, 0.0
        %v3132 = vmax.f32 %v3124, 0.0
        %v3133 = vmax.f32 %v3125, 0.0
        %v3134 = vmax.f32 %v3126, 0.0
        %v3135 = vmax.f32 %v3127, 0.0
        %v3136 = vmax.f32 %v3128, 0.0
        %v3137 = vmax.f32 %v3129, 0.0
        %3138 = vst.msk [vmem:[%s217] sm:$0xff] %vm1876, %v3130
        %3139 = vst.msk [vmem:[%s217 + $0x8] sm:$0xff] %vm1876, %v3131
        %3140 = vst.msk [vmem:[%s217 + $0x10] sm:$0xff] %vm1876, %v3132
        %3141 = vst.msk [vmem:[%s217 + $0x18] sm:$0xff] %vm1876, %v3133
        %3142 = vst.msk [vmem:[%s217 + $0x20] sm:$0xff] %vm1876, %v3134
        %3143 = vst.msk [vmem:[%s217 + $0x28] sm:$0xff] %vm1876, %v3135
        %3144 = vst.msk [vmem:[%s217 + $0x30] sm:$0xff] %vm1876, %v3136
        %3145 = vst.msk [vmem:[%s217 + $0x38] sm:$0xff] %vm1876, %v3137
        %s3146 = sand.u32 %s137, 1
        %s3147 = scalar_lea.sflag [#allocation4], %s3146
        %s3148 = sand.u32 %s137, 1
        %s3149 = smul.addr %s3148, 64
        %s3150 = scalar_lea.vmem [#allocation3], %s3149
        // Predicated region
        $region41: #{down_block_forward.1} parent=39 // pred_check
          %p3151 = pneg %p147
        $region42: #{down_block_forward.1} parent=39 // pred_check_branch
          %3153 = sbr.rel (%p3151) target = $region44
        $region43: #{down_block_forward.1} parent=39 // pred_region
          %3155 = vsyncadd %s3147, 0
          %s3156 = smul.addr %s19, 8
          %s3157 = smul.addr %s3156, 8
          %s3158 = scalar_lea.hbm %s5, %s3157
          %s3159 = sshll.u32 %s3150, 4
          %s3160 = int_to_ptr.vmem [resolvable:$true] %s3159
          %s3161 = sshll.u32 %s3158, 4
          %s3162 = int_to_ptr.hbm [resolvable:$true] %s3161
          %3167 = dma.vmem_to_hbm [thread:$0]  %s3160, 1024, %s3162, %s3147, 128, 128, 8
        $region44: #{down_block_forward.1} parent=39 // pred_fallthru
          _
      $region40: #{down_block_forward.1} parent=5 // pred_fallthru
        _
      %p3168 = scmp.le.s32.totalorder 2, %s14
      // Predicated region
      $region45: #{down_block_forward.1} parent=5 // pred_check
        %p3169 = pneg %p3168
      $region46: #{down_block_forward.1} parent=5 // pred_check_branch
        %3171 = sbr.rel (%p3169) target = $region48
      $region47: #{down_block_forward.1} parent=5 // pred_region
        %s3172 = ssub.s32 %s14, 2
        // Predicated region
        $region49: #{down_block_forward.1} parent=47 // pred_check
          %p3173 = pneg %p153
        $region50: #{down_block_forward.1} parent=47 // pred_check_branch
          %3175 = sbr.rel (%p3173) target = $region52
        $region51: #{down_block_forward.1} parent=47 // pred_region
          %s3176 = sand.u32 %s138, 1
          %s3177 = scalar_lea.sflag [#allocation4], %s3176
          %s3178 = sand.u32 %s138, 1
          %s3179 = smul.addr %s3178, 64
          %s3180 = scalar_lea.vmem [#allocation3], %s3179
          %3182 = dma.done %s3177, 1024
        $region52: #{down_block_forward.1} parent=47 // pred_fallthru
          _
      $region48: #{down_block_forward.1} parent=5 // pred_fallthru
        _
    $region6: #{down_block_forward.1} parent=1 // loop_footer
      %s18 = sadd.s32 1, %s14
    $region7: #{down_block_forward.1} parent=1 // loop_footer_branch
      %13 = sbr.rel target = $region3
    $region8: #{down_block_forward.1} parent=1 // loop_exit
      _
    %3183 = vsyncpa [#allocation4], 1
    %s3184 = scalar_lea.sflag [#allocation4], 1
    %3185 = vsyncpa %s3184, 1

</llo_original>
